<compile_context>
chip_gen: v7x
topology: tpu7x:2x2x1
jax: 0.10.0
libtpu: 0.0.40
codegen_flags: <defaults>
</compile_context>

<pallas_src>
import functools

import jax
import jax.numpy as jnp
from jax.experimental import pallas as pl
from jax.experimental.pallas import tpu as pltpu

K = 3  # all convs and the pool use 3x3 windows


def _conv_from_taps(tap_slices, w_ref, b_ref, Ho, Wo):
    """tap_slices: K*K values of shape [Ho, Wo, C] in (kh, kw) order.
    w_ref: [K*K*C, Cout] im2col weights, b_ref: [1, Cout].
    One MXU matmul, contraction dim = K*K*C."""
    patches = jnp.concatenate(tap_slices, axis=-1)            # [Ho, Wo, K*K*C]
    m = patches.reshape(Ho * Wo, patches.shape[-1])
    y = jnp.dot(m, w_ref[...], preferred_element_type=jnp.float32) + b_ref[...]
    return y.reshape(Ho, Wo, -1)                              # [Ho, Wo, Cout]


def _stem_kernel(xph_ref, w1_ref, b1_ref, w2_ref, b2_ref, w3_ref, b3_ref,
                 o_ref, p1_scr, p2_scr, p3_scr,
                 *, Cin, Cmid, Cout, H1, W1, Hf, Wf):
    # ---------------- conv1: 3x3, stride 2, pad 1 ----------------
    # xph holds the zero-padded input phase-decomposed 2x2 along H/W:
    # channel block p = ph*2+pw, spatial (h, w)  <->  padded input (2h+ph, 2w+pw).
    # Tap (kh, kw) of the stride-2 conv therefore reads phase (kh%2, kw%2) at a
    # unit-stride offset (kh//2, kw//2).
    xph = xph_ref[0]                                          # [H1+1, W1+1, 4*Cin]
    taps = []
    for kh in range(K):
        for kw in range(K):
            p = (kh % 2) * 2 + (kw % 2)
            oh, ow = kh // 2, kw // 2
            taps.append(xph[oh:oh + H1, ow:ow + W1, p * Cin:(p + 1) * Cin])
    y1 = _conv_from_taps(taps, w1_ref, b1_ref, H1, W1)        # [H1, W1, Cmid]

    # zero-pad conv1 output in VMEM scratch (halo = 1 for the next 3x3 conv)
    p1_scr[...] = jnp.zeros_like(p1_scr)
    p1_scr[1:1 + H1, 1:1 + W1, :] = y1

    # ---------------- conv2: 3x3, stride 1, pad 1 ----------------
    p1 = p1_scr[...]
    taps = [p1[kh:kh + H1, kw:kw + W1, :] for kh in range(K) for kw in range(K)]
    y2 = _conv_from_taps(taps, w2_ref, b2_ref, H1, W1)        # [H1, W1, Cmid]

    p2_scr[...] = jnp.zeros_like(p2_scr)
    p2_scr[1:1 + H1, 1:1 + W1, :] = y2

    # ---------------- conv3: 3x3, stride 1, pad 1 ----------------
    p2 = p2_scr[...]
    taps = [p2[kh:kh + H1, kw:kw + W1, :] for kh in range(K) for kw in range(K)]
    y3 = _conv_from_taps(taps, w3_ref, b3_ref, H1, W1)        # [H1, W1, Cout]

    # ---------------- maxpool 3x3, stride 2, pad 1 ----------------
    # PyTorch semantics: implicit -inf padding.
    p3_scr[...] = jnp.full(p3_scr.shape, -jnp.inf, p3_scr.dtype)
    p3_scr[1:1 + H1, 1:1 + W1, :] = y3
    p3 = p3_scr[...]                                          # [H1+2, W1+2, Cout]

    # stride-1 3x3 max (unit-stride slices, VPU), ...
    m = p3[0:H1, 0:W1, :]
    for kh in range(K):
        for kw in range(K):
            if kh == 0 and kw == 0:
                continue
            m = jnp.maximum(m, p3[kh:kh + H1, kw:kw + W1, :])
    # ... then stride-2 subsample via unit slices + concatenation (no strided access).
    rows = jnp.concatenate([m[2 * i:2 * i + 1, :, :] for i in range(Hf)], axis=0)
    pooled = jnp.concatenate([rows[:, 2 * j:2 * j + 1, :] for j in range(Wf)], axis=1)

    o_ref[0] = pooled.astype(o_ref.dtype)


def res2net_stem(x_nchw, w1, b1, w2, b2, w3, b3):
    """Forward of Res2NetStem.  x_nchw: [N, Cin, H, W] (H, W even).
    w*: PyTorch Conv2d weights [Cout, Cin, 3, 3];  b*: [Cout]."""
    N, Cin, H, W = x_nchw.shape
    assert H % 2 == 0 and W % 2 == 0, "stem expects even spatial dims"
    Cmid = w1.shape[0]
    Cout = w3.shape[0]
    H1, W1 = (H + 2 - K) // 2 + 1, (W + 2 - K) // 2 + 1       # conv1 output (= H//2, W//2)
    Hf, Wf = (H1 - 1) // 2 + 1, (W1 - 1) // 2 + 1             # maxpool output

    # ---- glue (small, XLA-side): NCHW->NHWC, zero-pad, 2x2 phase decomposition ----
    x = jnp.transpose(x_nchw, (0, 2, 3, 1)).astype(jnp.float32)
    xp = jnp.pad(x, ((0, 0), (1, 1), (1, 1), (0, 0)))         # [N, H+2, W+2, Cin]
    xph = jnp.concatenate(
        [xp[:, ph::2, pw::2, :] for ph in range(2) for pw in range(2)],
        axis=-1)                                              # [N, H1+1, W1+1, 4*Cin]
    Hp2, Wp2 = H1 + 1, W1 + 1

    def im2col_w(w):   # [Cout, Cin, K, K] -> [K*K*Cin, Cout], (kh, kw, c) ordering
        co, ci = w.shape[0], w.shape[1]
        return jnp.transpose(w, (2, 3, 1, 0)).reshape(K * K * ci, co).astype(jnp.float32)

    w1c, w2c, w3c = im2col_w(w1), im2col_w(w2), im2col_w(w3)
    b1r = jnp.reshape(b1, (1, Cmid)).astype(jnp.float32)
    b2r = jnp.reshape(b2, (1, Cmid)).astype(jnp.float32)
    b3r = jnp.reshape(b3, (1, Cout)).astype(jnp.float32)

    kern = functools.partial(_stem_kernel, Cin=Cin, Cmid=Cmid, Cout=Cout,
                             H1=H1, W1=W1, Hf=Hf, Wf=Wf)

    flops = 2 * N * H1 * W1 * K * K * (Cin * Cmid + Cmid * Cmid + Cmid * Cout)
    bytes_accessed = 4 * (xph.size + N * Hf * Wf * Cout
                          + w1c.size + w2c.size + w3c.size + 2 * Cmid + Cout)

    out_nhwc = pl.pallas_call(
        kern,
        out_shape=jax.ShapeDtypeStruct((N, Hf, Wf, Cout), jnp.float32),
        grid_spec=pltpu.PrefetchScalarGridSpec(
            num_scalar_prefetch=0,
            grid=(N,),                                        # one image per grid step
            in_specs=[
                pl.BlockSpec((1, Hp2, Wp2, 4 * Cin), lambda n: (n, 0, 0, 0)),
                pl.BlockSpec((K * K * Cin, Cmid), lambda n: (0, 0)),
                pl.BlockSpec((1, Cmid), lambda n: (0, 0)),
                pl.BlockSpec((K * K * Cmid, Cmid), lambda n: (0, 0)),
                pl.BlockSpec((1, Cmid), lambda n: (0, 0)),
                pl.BlockSpec((K * K * Cmid, Cout), lambda n: (0, 0)),
                pl.BlockSpec((1, Cout), lambda n: (0, 0)),
            ],
            out_specs=pl.BlockSpec((1, Hf, Wf, Cout), lambda n: (n, 0, 0, 0)),
            scratch_shapes=[
                pltpu.VMEM((H1 + 2, W1 + 2, Cmid), jnp.float32),   # padded conv1 out
                pltpu.VMEM((H1 + 2, W1 + 2, Cmid), jnp.float32),   # padded conv2 out
                pltpu.VMEM((H1 + 2, W1 + 2, Cout), jnp.float32),   # padded conv3 out
            ],
        ),
        compiler_params=pltpu.CompilerParams(
            dimension_semantics=("parallel",),                # split batch across cores
            vmem_limit_bytes=32 * 1024 * 1024,
        ),
        cost_estimate=pl.CostEstimate(flops=int(flops), transcendentals=0,
                                      bytes_accessed=int(bytes_accessed)),
    )(xph, w1c, b1r, w2c, b2r, w3c, b3r)

    return jnp.transpose(out_nhwc, (0, 3, 1, 2))              # back to NCHW


def _reference(x, w1, b1, w2, b2, w3, b3):
    """Pure-JAX reference mirroring the PyTorch Res2NetStem forward."""
    def conv(x, w, b, stride):
        y = jax.lax.conv_general_dilated(
            x, w, window_strides=(stride, stride), padding=((1, 1), (1, 1)),
            dimension_numbers=('NCHW', 'OIHW', 'NCHW'),
            precision=jax.lax.Precision.HIGHEST)
        return y + b.reshape(1, -1, 1, 1)

    y = conv(x, w1, b1, 2)
    y = conv(y, w2, b2, 1)
    y = conv(y, w3, b3, 1)
    y = jax.lax.reduce_window(
        y, -jnp.inf, jax.lax.max,
        window_dimensions=(1, 1, 3, 3), window_strides=(1, 1, 2, 2),
        padding=((0, 0), (0, 0), (1, 1), (1, 1)))
    return y


if __name__ == "__main__":
    # Res2NetStem(in_channels=4, out_channels=8) on a [2, 4, 16, 16] input.
    N, Cin, H, W = 2, 4, 16, 16
    Cout = 8
    Cmid = Cout // 2

    key = jax.random.PRNGKey(0)
    ks = jax.random.split(key, 7)
    x = jax.random.normal(ks[0], (N, Cin, H, W), jnp.float32)
    w1 = jax.random.normal(ks[1], (Cmid, Cin, K, K), jnp.float32) * 0.2
    b1 = jax.random.normal(ks[2], (Cmid,), jnp.float32) * 0.1
    w2 = jax.random.normal(ks[3], (Cmid, Cmid, K, K), jnp.float32) * 0.2
    b2 = jax.random.normal(ks[4], (Cmid,), jnp.float32) * 0.1
    w3 = jax.random.normal(ks[5], (Cout, Cmid, K, K), jnp.float32) * 0.2
    b3 = jax.random.normal(ks[6], (Cout,), jnp.float32) * 0.1

    out = res2net_stem(x, w1, b1, w2, b2, w3, b3)
    out = jax.block_until_ready(out)

    ref = _reference(x, w1, b1, w2, b2, w3, b3)
    assert out.shape == ref.shape == (N, Cout, H // 4, W // 4), (out.shape, ref.shape)
    err = float(jnp.max(jnp.abs(out - ref)))
    assert jnp.allclose(out, ref, atol=5e-3, rtol=5e-3), err

    print("KERNEL_OK")
</pallas_src>

<mosaic_0001>
module attributes {stable_mosaic.version = 11 : i64} {
  func.func @_stem_kernel(%arg0: i32, %arg1: memref<1x9x9x16xf32, #tpu.memory_space<vmem>>, %arg2: memref<36x4xf32, #tpu.memory_space<vmem>>, %arg3: memref<1x4xf32, #tpu.memory_space<vmem>>, %arg4: memref<36x4xf32, #tpu.memory_space<vmem>>, %arg5: memref<1x4xf32, #tpu.memory_space<vmem>>, %arg6: memref<36x8xf32, #tpu.memory_space<vmem>>, %arg7: memref<1x8xf32, #tpu.memory_space<vmem>>, %arg8: memref<1x4x4x8xf32, #tpu.memory_space<vmem>>, %arg9: memref<10x10x4xf32, #tpu.memory_space<vmem>>, %arg10: memref<10x10x4xf32, #tpu.memory_space<vmem>>, %arg11: memref<10x10x8xf32, #tpu.memory_space<vmem>>) attributes {dimension_semantics = [#tpu.dimension_semantics<parallel>], iteration_bounds = array<i64: 2>, scalar_prefetch = 0 : i64, scratch_operands = 3 : i64, tpu.core_type = #tpu.core_type<tc>, window_params = [{transform_indices = @transform_0, window_bounds = array<i64: 1, 9, 9, 16>}, {pipeline_mode = #tpu.pipeline_mode<synchronous>, transform_indices = @transform_1, window_bounds = array<i64: 36, 4>}, {pipeline_mode = #tpu.pipeline_mode<synchronous>, transform_indices = @transform_2, window_bounds = array<i64: 1, 4>}, {pipeline_mode = #tpu.pipeline_mode<synchronous>, transform_indices = @transform_3, window_bounds = array<i64: 36, 4>}, {pipeline_mode = #tpu.pipeline_mode<synchronous>, transform_indices = @transform_4, window_bounds = array<i64: 1, 4>}, {pipeline_mode = #tpu.pipeline_mode<synchronous>, transform_indices = @transform_5, window_bounds = array<i64: 36, 8>}, {pipeline_mode = #tpu.pipeline_mode<synchronous>, transform_indices = @transform_6, window_bounds = array<i64: 1, 8>}, {transform_indices = @transform_7, window_bounds = array<i64: 1, 4, 4, 8>}]} {
    %c0 = arith.constant 0 : index
    %c0_0 = arith.constant 0 : index
    %c0_1 = arith.constant 0 : index
    %c0_2 = arith.constant 0 : index
    %0 = vector.load %arg1[%c0, %c0_0, %c0_1, %c0_2] : memref<1x9x9x16xf32, #tpu.memory_space<vmem>>, vector<1x9x9x16xf32>
    %1 = vector.shape_cast %0 : vector<1x9x9x16xf32> to vector<9x9x16xf32>
    %2 = vector.extract_strided_slice %1 {offsets = [0, 0, 0], sizes = [8, 8, 4], strides = [1, 1, 1]} : vector<9x9x16xf32> to vector<8x8x4xf32>
    %3 = vector.extract_strided_slice %1 {offsets = [0, 0, 4], sizes = [8, 8, 4], strides = [1, 1, 1]} : vector<9x9x16xf32> to vector<8x8x4xf32>
    %4 = vector.extract_strided_slice %1 {offsets = [0, 1, 0], sizes = [8, 8, 4], strides = [1, 1, 1]} : vector<9x9x16xf32> to vector<8x8x4xf32>
    %5 = vector.extract_strided_slice %1 {offsets = [0, 0, 8], sizes = [8, 8, 4], strides = [1, 1, 1]} : vector<9x9x16xf32> to vector<8x8x4xf32>
    %6 = vector.extract_strided_slice %1 {offsets = [0, 0, 12], sizes = [8, 8, 4], strides = [1, 1, 1]} : vector<9x9x16xf32> to vector<8x8x4xf32>
    %7 = vector.extract_strided_slice %1 {offsets = [0, 1, 8], sizes = [8, 8, 4], strides = [1, 1, 1]} : vector<9x9x16xf32> to vector<8x8x4xf32>
    %8 = vector.extract_strided_slice %1 {offsets = [1, 0, 0], sizes = [8, 8, 4], strides = [1, 1, 1]} : vector<9x9x16xf32> to vector<8x8x4xf32>
    %9 = vector.extract_strided_slice %1 {offsets = [1, 0, 4], sizes = [8, 8, 4], strides = [1, 1, 1]} : vector<9x9x16xf32> to vector<8x8x4xf32>
    %10 = vector.extract_strided_slice %1 {offsets = [1, 1, 0], sizes = [8, 8, 4], strides = [1, 1, 1]} : vector<9x9x16xf32> to vector<8x8x4xf32>
    %11 = tpu.concatenate %2, %3, %4, %5, %6, %7, %8, %9, %10 in 2 : vector<8x8x4xf32>, vector<8x8x4xf32>, vector<8x8x4xf32>, vector<8x8x4xf32>, vector<8x8x4xf32>, vector<8x8x4xf32>, vector<8x8x4xf32>, vector<8x8x4xf32>, vector<8x8x4xf32> -> vector<8x8x36xf32>
    %12 = vector.shape_cast %11 : vector<8x8x36xf32> to vector<64x36xf32>
    %c0_3 = arith.constant 0 : index
    %c0_4 = arith.constant 0 : index
    %13 = vector.load %arg2[%c0_3, %c0_4] : memref<36x4xf32, #tpu.memory_space<vmem>>, vector<36x4xf32>
    %cst = arith.constant dense<0.000000e+00> : vector<64x4xf32>
    %14 = tpu.matmul %12, %13, %cst {dimension_numbers = #tpu.dot_dimension_numbers<[1], [0], [0], [1], [0, 0, 1, 1], [], []>} : vector<64x36xf32>, vector<36x4xf32>, vector<64x4xf32> -> vector<64x4xf32>
    %c0_5 = arith.constant 0 : index
    %c0_6 = arith.constant 0 : index
    %15 = vector.load %arg3[%c0_5, %c0_6] : memref<1x4xf32, #tpu.memory_space<vmem>>, vector<1x4xf32>
    %16 = vector.broadcast %15 : vector<1x4xf32> to vector<64x4xf32>
    %17 = arith.addf %14, %16 : vector<64x4xf32>
    %18 = vector.shape_cast %17 : vector<64x4xf32> to vector<8x8x4xf32>
    %cst_7 = arith.constant 0.000000e+00 : f32
    %19 = vector.broadcast %cst_7 : f32 to vector<10x10x4xf32>
    %c0_8 = arith.constant 0 : index
    %c0_9 = arith.constant 0 : index
    %c0_10 = arith.constant 0 : index
    %20 = vector.load %arg9[%c0_8, %c0_9, %c0_10] : memref<10x10x4xf32, #tpu.memory_space<vmem>>, vector<10x10x4xf32>
    tpu.vector_store %arg9[%c0_8, %c0_9, %c0_10], %19 {strides = array<i32>} : memref<10x10x4xf32, #tpu.memory_space<vmem>>, vector<10x10x4xf32>,
    %c1 = arith.constant 1 : index
    %c1_11 = arith.constant 1 : index
    %c0_12 = arith.constant 0 : index
    %21 = vector.load %arg9[%c1, %c1_11, %c0_12] : memref<10x10x4xf32, #tpu.memory_space<vmem>>, vector<8x8x4xf32>
    tpu.vector_store %arg9[%c1, %c1_11, %c0_12], %18 {strides = array<i32>} : memref<10x10x4xf32, #tpu.memory_space<vmem>>, vector<8x8x4xf32>,
    %c0_13 = arith.constant 0 : index
    %c0_14 = arith.constant 0 : index
    %c0_15 = arith.constant 0 : index
    %22 = vector.load %arg9[%c0_13, %c0_14, %c0_15] : memref<10x10x4xf32, #tpu.memory_space<vmem>>, vector<10x10x4xf32>
    %23 = vector.extract_strided_slice %22 {offsets = [0, 0, 0], sizes = [8, 8, 4], strides = [1, 1, 1]} : vector<10x10x4xf32> to vector<8x8x4xf32>
    %24 = vector.extract_strided_slice %22 {offsets = [0, 1, 0], sizes = [8, 8, 4], strides = [1, 1, 1]} : vector<10x10x4xf32> to vector<8x8x4xf32>
    %25 = vector.extract_strided_slice %22 {offsets = [0, 2, 0], sizes = [8, 8, 4], strides = [1, 1, 1]} : vector<10x10x4xf32> to vector<8x8x4xf32>
    %26 = vector.extract_strided_slice %22 {offsets = [1, 0, 0], sizes = [8, 8, 4], strides = [1, 1, 1]} : vector<10x10x4xf32> to vector<8x8x4xf32>
    %27 = vector.extract_strided_slice %22 {offsets = [1, 1, 0], sizes = [8, 8, 4], strides = [1, 1, 1]} : vector<10x10x4xf32> to vector<8x8x4xf32>
    %28 = vector.extract_strided_slice %22 {offsets = [1, 2, 0], sizes = [8, 8, 4], strides = [1, 1, 1]} : vector<10x10x4xf32> to vector<8x8x4xf32>
    %29 = vector.extract_strided_slice %22 {offsets = [2, 0, 0], sizes = [8, 8, 4], strides = [1, 1, 1]} : vector<10x10x4xf32> to vector<8x8x4xf32>
    %30 = vector.extract_strided_slice %22 {offsets = [2, 1, 0], sizes = [8, 8, 4], strides = [1, 1, 1]} : vector<10x10x4xf32> to vector<8x8x4xf32>
    %31 = vector.extract_strided_slice %22 {offsets = [2, 2, 0], sizes = [8, 8, 4], strides = [1, 1, 1]} : vector<10x10x4xf32> to vector<8x8x4xf32>
    %32 = tpu.concatenate %23, %24, %25, %26, %27, %28, %29, %30, %31 in 2 : vector<8x8x4xf32>, vector<8x8x4xf32>, vector<8x8x4xf32>, vector<8x8x4xf32>, vector<8x8x4xf32>, vector<8x8x4xf32>, vector<8x8x4xf32>, vector<8x8x4xf32>, vector<8x8x4xf32> -> vector<8x8x36xf32>
    %33 = vector.shape_cast %32 : vector<8x8x36xf32> to vector<64x36xf32>
    %c0_16 = arith.constant 0 : index
    %c0_17 = arith.constant 0 : index
    %34 = vector.load %arg4[%c0_16, %c0_17] : memref<36x4xf32, #tpu.memory_space<vmem>>, vector<36x4xf32>
    %cst_18 = arith.constant dense<0.000000e+00> : vector<64x4xf32>
    %35 = tpu.matmul %33, %34, %cst_18 {dimension_numbers = #tpu.dot_dimension_numbers<[1], [0], [0], [1], [0, 0, 1, 1], [], []>} : vector<64x36xf32>, vector<36x4xf32>, vector<64x4xf32> -> vector<64x4xf32>
    %c0_19 = arith.constant 0 : index
    %c0_20 = arith.constant 0 : index
    %36 = vector.load %arg5[%c0_19, %c0_20] : memref<1x4xf32, #tpu.memory_space<vmem>>, vector<1x4xf32>
    %37 = vector.broadcast %36 : vector<1x4xf32> to vector<64x4xf32>
    %38 = arith.addf %35, %37 : vector<64x4xf32>
    %39 = vector.shape_cast %38 : vector<64x4xf32> to vector<8x8x4xf32>
    %cst_21 = arith.constant 0.000000e+00 : f32
    %40 = vector.broadcast %cst_21 : f32 to vector<10x10x4xf32>
    %c0_22 = arith.constant 0 : index
    %c0_23 = arith.constant 0 : index
    %c0_24 = arith.constant 0 : index
    %41 = vector.load %arg10[%c0_22, %c0_23, %c0_24] : memref<10x10x4xf32, #tpu.memory_space<vmem>>, vector<10x10x4xf32>
    tpu.vector_store %arg10[%c0_22, %c0_23, %c0_24], %40 {strides = array<i32>} : memref<10x10x4xf32, #tpu.memory_space<vmem>>, vector<10x10x4xf32>,
    %c1_25 = arith.constant 1 : index
    %c1_26 = arith.constant 1 : index
    %c0_27 = arith.constant 0 : index
    %42 = vector.load %arg10[%c1_25, %c1_26, %c0_27] : memref<10x10x4xf32, #tpu.memory_space<vmem>>, vector<8x8x4xf32>
    tpu.vector_store %arg10[%c1_25, %c1_26, %c0_27], %39 {strides = array<i32>} : memref<10x10x4xf32, #tpu.memory_space<vmem>>, vector<8x8x4xf32>,
    %c0_28 = arith.constant 0 : index
    %c0_29 = arith.constant 0 : index
    %c0_30 = arith.constant 0 : index
    %43 = vector.load %arg10[%c0_28, %c0_29, %c0_30] : memref<10x10x4xf32, #tpu.memory_space<vmem>>, vector<10x10x4xf32>
    %44 = vector.extract_strided_slice %43 {offsets = [0, 0, 0], sizes = [8, 8, 4], strides = [1, 1, 1]} : vector<10x10x4xf32> to vector<8x8x4xf32>
    %45 = vector.extract_strided_slice %43 {offsets = [0, 1, 0], sizes = [8, 8, 4], strides = [1, 1, 1]} : vector<10x10x4xf32> to vector<8x8x4xf32>
    %46 = vector.extract_strided_slice %43 {offsets = [0, 2, 0], sizes = [8, 8, 4], strides = [1, 1, 1]} : vector<10x10x4xf32> to vector<8x8x4xf32>
    %47 = vector.extract_strided_slice %43 {offsets = [1, 0, 0], sizes = [8, 8, 4], strides = [1, 1, 1]} : vector<10x10x4xf32> to vector<8x8x4xf32>
    %48 = vector.extract_strided_slice %43 {offsets = [1, 1, 0], sizes = [8, 8, 4], strides = [1, 1, 1]} : vector<10x10x4xf32> to vector<8x8x4xf32>
    %49 = vector.extract_strided_slice %43 {offsets = [1, 2, 0], sizes = [8, 8, 4], strides = [1, 1, 1]} : vector<10x10x4xf32> to vector<8x8x4xf32>
    %50 = vector.extract_strided_slice %43 {offsets = [2, 0, 0], sizes = [8, 8, 4], strides = [1, 1, 1]} : vector<10x10x4xf32> to vector<8x8x4xf32>
    %51 = vector.extract_strided_slice %43 {offsets = [2, 1, 0], sizes = [8, 8, 4], strides = [1, 1, 1]} : vector<10x10x4xf32> to vector<8x8x4xf32>
    %52 = vector.extract_strided_slice %43 {offsets = [2, 2, 0], sizes = [8, 8, 4], strides = [1, 1, 1]} : vector<10x10x4xf32> to vector<8x8x4xf32>
    %53 = tpu.concatenate %44, %45, %46, %47, %48, %49, %50, %51, %52 in 2 : vector<8x8x4xf32>, vector<8x8x4xf32>, vector<8x8x4xf32>, vector<8x8x4xf32>, vector<8x8x4xf32>, vector<8x8x4xf32>, vector<8x8x4xf32>, vector<8x8x4xf32>, vector<8x8x4xf32> -> vector<8x8x36xf32>
    %54 = vector.shape_cast %53 : vector<8x8x36xf32> to vector<64x36xf32>
    %c0_31 = arith.constant 0 : index
    %c0_32 = arith.constant 0 : index
    %55 = vector.load %arg6[%c0_31, %c0_32] : memref<36x8xf32, #tpu.memory_space<vmem>>, vector<36x8xf32>
    %cst_33 = arith.constant dense<0.000000e+00> : vector<64x8xf32>
    %56 = tpu.matmul %54, %55, %cst_33 {dimension_numbers = #tpu.dot_dimension_numbers<[1], [0], [0], [1], [0, 0, 1, 1], [], []>} : vector<64x36xf32>, vector<36x8xf32>, vector<64x8xf32> -> vector<64x8xf32>
    %c0_34 = arith.constant 0 : index
    %c0_35 = arith.constant 0 : index
    %57 = vector.load %arg7[%c0_34, %c0_35] : memref<1x8xf32, #tpu.memory_space<vmem>>, vector<1x8xf32>
    %58 = vector.broadcast %57 : vector<1x8xf32> to vector<64x8xf32>
    %59 = arith.addf %56, %58 : vector<64x8xf32>
    %60 = vector.shape_cast %59 : vector<64x8xf32> to vector<8x8x8xf32>
    %cst_36 = arith.constant 0xFF800000 : f32
    %61 = vector.broadcast %cst_36 : f32 to vector<10x10x8xf32>
    %c0_37 = arith.constant 0 : index
    %c0_38 = arith.constant 0 : index
    %c0_39 = arith.constant 0 : index
    %62 = vector.load %arg11[%c0_37, %c0_38, %c0_39] : memref<10x10x8xf32, #tpu.memory_space<vmem>>, vector<10x10x8xf32>
    tpu.vector_store %arg11[%c0_37, %c0_38, %c0_39], %61 {strides = array<i32>} : memref<10x10x8xf32, #tpu.memory_space<vmem>>, vector<10x10x8xf32>,
    %c1_40 = arith.constant 1 : index
    %c1_41 = arith.constant 1 : index
    %c0_42 = arith.constant 0 : index
    %63 = vector.load %arg11[%c1_40, %c1_41, %c0_42] : memref<10x10x8xf32, #tpu.memory_space<vmem>>, vector<8x8x8xf32>
    tpu.vector_store %arg11[%c1_40, %c1_41, %c0_42], %60 {strides = array<i32>} : memref<10x10x8xf32, #tpu.memory_space<vmem>>, vector<8x8x8xf32>,
    %c0_43 = arith.constant 0 : index
    %c0_44 = arith.constant 0 : index
    %c0_45 = arith.constant 0 : index
    %64 = vector.load %arg11[%c0_43, %c0_44, %c0_45] : memref<10x10x8xf32, #tpu.memory_space<vmem>>, vector<10x10x8xf32>
    %65 = vector.extract_strided_slice %64 {offsets = [0, 0, 0], sizes = [8, 8, 8], strides = [1, 1, 1]} : vector<10x10x8xf32> to vector<8x8x8xf32>
    %66 = vector.extract_strided_slice %64 {offsets = [0, 1, 0], sizes = [8, 8, 8], strides = [1, 1, 1]} : vector<10x10x8xf32> to vector<8x8x8xf32>
    %67 = arith.maximumf %65, %66 : vector<8x8x8xf32>
    %68 = vector.extract_strided_slice %64 {offsets = [0, 2, 0], sizes = [8, 8, 8], strides = [1, 1, 1]} : vector<10x10x8xf32> to vector<8x8x8xf32>
    %69 = arith.maximumf %67, %68 : vector<8x8x8xf32>
    %70 = vector.extract_strided_slice %64 {offsets = [1, 0, 0], sizes = [8, 8, 8], strides = [1, 1, 1]} : vector<10x10x8xf32> to vector<8x8x8xf32>
    %71 = arith.maximumf %69, %70 : vector<8x8x8xf32>
    %72 = vector.extract_strided_slice %64 {offsets = [1, 1, 0], sizes = [8, 8, 8], strides = [1, 1, 1]} : vector<10x10x8xf32> to vector<8x8x8xf32>
    %73 = arith.maximumf %71, %72 : vector<8x8x8xf32>
    %74 = vector.extract_strided_slice %64 {offsets = [1, 2, 0], sizes = [8, 8, 8], strides = [1, 1, 1]} : vector<10x10x8xf32> to vector<8x8x8xf32>
    %75 = arith.maximumf %73, %74 : vector<8x8x8xf32>
    %76 = vector.extract_strided_slice %64 {offsets = [2, 0, 0], sizes = [8, 8, 8], strides = [1, 1, 1]} : vector<10x10x8xf32> to vector<8x8x8xf32>
    %77 = arith.maximumf %75, %76 : vector<8x8x8xf32>
    %78 = vector.extract_strided_slice %64 {offsets = [2, 1, 0], sizes = [8, 8, 8], strides = [1, 1, 1]} : vector<10x10x8xf32> to vector<8x8x8xf32>
    %79 = arith.maximumf %77, %78 : vector<8x8x8xf32>
    %80 = vector.extract_strided_slice %64 {offsets = [2, 2, 0], sizes = [8, 8, 8], strides = [1, 1, 1]} : vector<10x10x8xf32> to vector<8x8x8xf32>
    %81 = arith.maximumf %79, %80 : vector<8x8x8xf32>
    %82 = vector.extract_strided_slice %81 {offsets = [0, 0, 0], sizes = [1, 8, 8], strides = [1, 1, 1]} : vector<8x8x8xf32> to vector<1x8x8xf32>
    %83 = vector.extract_strided_slice %81 {offsets = [2, 0, 0], sizes = [1, 8, 8], strides = [1, 1, 1]} : vector<8x8x8xf32> to vector<1x8x8xf32>
    %84 = vector.extract_strided_slice %81 {offsets = [4, 0, 0], sizes = [1, 8, 8], strides = [1, 1, 1]} : vector<8x8x8xf32> to vector<1x8x8xf32>
    %85 = vector.extract_strided_slice %81 {offsets = [6, 0, 0], sizes = [1, 8, 8], strides = [1, 1, 1]} : vector<8x8x8xf32> to vector<1x8x8xf32>
    %86 = tpu.concatenate %82, %83, %84, %85 in 0 : vector<1x8x8xf32>, vector<1x8x8xf32>, vector<1x8x8xf32>, vector<1x8x8xf32> -> vector<4x8x8xf32>
    %87 = vector.extract_strided_slice %86 {offsets = [0, 0, 0], sizes = [4, 1, 8], strides = [1, 1, 1]} : vector<4x8x8xf32> to vector<4x1x8xf32>
    %88 = vector.extract_strided_slice %86 {offsets = [0, 2, 0], sizes = [4, 1, 8], strides = [1, 1, 1]} : vector<4x8x8xf32> to vector<4x1x8xf32>
    %89 = vector.extract_strided_slice %86 {offsets = [0, 4, 0], sizes = [4, 1, 8], strides = [1, 1, 1]} : vector<4x8x8xf32> to vector<4x1x8xf32>
    %90 = vector.extract_strided_slice %86 {offsets = [0, 6, 0], sizes = [4, 1, 8], strides = [1, 1, 1]} : vector<4x8x8xf32> to vector<4x1x8xf32>
    %91 = tpu.concatenate %87, %88, %89, %90 in 1 : vector<4x1x8xf32>, vector<4x1x8xf32>, vector<4x1x8xf32>, vector<4x1x8xf32> -> vector<4x4x8xf32>
    %c0_46 = arith.constant 0 : index
    %c0_47 = arith.constant 0 : index
    %c0_48 = arith.constant 0 : index
    %c0_49 = arith.constant 0 : index
    %92 = vector.load %arg8[%c0_46, %c0_47, %c0_48, %c0_49] : memref<1x4x4x8xf32, #tpu.memory_space<vmem>>, vector<1x4x4x8xf32>
    %93 = vector.shape_cast %92 : vector<1x4x4x8xf32> to vector<4x4x8xf32>
    %94 = vector.shape_cast %91 : vector<4x4x8xf32> to vector<1x4x4x8xf32>
    tpu.vector_store %arg8[%c0_46, %c0_47, %c0_48, %c0_49], %94 {strides = array<i32>} : memref<1x4x4x8xf32, #tpu.memory_space<vmem>>, vector<1x4x4x8xf32>,
    return
  }
  func.func @transform_0(%arg0: i32) -> (i32, i32, i32, i32) {
    %c0_i32 = arith.constant 0 : i32
    %c0_i32_0 = arith.constant 0 : i32
    %c0_i32_1 = arith.constant 0 : i32
    %c0_i32_2 = arith.constant 0 : i32
    return %arg0, %c0_i32, %c0_i32_0, %c0_i32_1 : i32, i32, i32, i32
  }
  func.func @transform_1(%arg0: i32) -> (i32, i32) {
    %c0_i32 = arith.constant 0 : i32
    %c0_i32_0 = arith.constant 0 : i32
    %c0_i32_1 = arith.constant 0 : i32
    return %c0_i32, %c0_i32_0 : i32, i32
  }
  func.func @transform_2(%arg0: i32) -> (i32, i32) {
    %c0_i32 = arith.constant 0 : i32
    %c0_i32_0 = arith.constant 0 : i32
    %c0_i32_1 = arith.constant 0 : i32
    return %c0_i32, %c0_i32_0 : i32, i32
  }
  func.func @transform_3(%arg0: i32) -> (i32, i32) {
    %c0_i32 = arith.constant 0 : i32
    %c0_i32_0 = arith.constant 0 : i32
    %c0_i32_1 = arith.constant 0 : i32
    return %c0_i32, %c0_i32_0 : i32, i32
  }
  func.func @transform_4(%arg0: i32) -> (i32, i32) {
    %c0_i32 = arith.constant 0 : i32
    %c0_i32_0 = arith.constant 0 : i32
    %c0_i32_1 = arith.constant 0 : i32
    return %c0_i32, %c0_i32_0 : i32, i32
  }
  func.func @transform_5(%arg0: i32) -> (i32, i32) {
    %c0_i32 = arith.constant 0 : i32
    %c0_i32_0 = arith.constant 0 : i32
    %c0_i32_1 = arith.constant 0 : i32
    return %c0_i32, %c0_i32_0 : i32, i32
  }
  func.func @transform_6(%arg0: i32) -> (i32, i32) {
    %c0_i32 = arith.constant 0 : i32
    %c0_i32_0 = arith.constant 0 : i32
    %c0_i32_1 = arith.constant 0 : i32
    return %c0_i32, %c0_i32_0 : i32, i32
  }
  func.func @transform_7(%arg0: i32) -> (i32, i32, i32, i32) {
    %c0_i32 = arith.constant 0 : i32
    %c0_i32_0 = arith.constant 0 : i32
    %c0_i32_1 = arith.constant 0 : i32
    %c0_i32_2 = arith.constant 0 : i32
    return %arg0, %c0_i32, %c0_i32_0, %c0_i32_1 : i32, i32, i32, i32
  }
}

</mosaic_0001>

<llo_original>
// kernel: tpu_custom_call.1
$region0: #{tpu_custom_call.1}
  #allocation0 [shape = 'u32[]', space=smem, size = 0x4, offset = 0x4, fixed_abs, tag = 'smem constant byte address 0x4 - core index']
  #allocation1 [shape = 'u32[144,128]{1,0:T(1,128)}', space=vmem, size = 0x12000, scoped, tag = 'internal scratch']
  #allocation2 [shape = 'f32[10,10,4]{2,1,0:T(8,128)}', space=vmem, size = 0x14000, scoped, tag = 'scratch operand']
  #allocation3 [shape = 'f32[10,10,4]{2,1,0:T(8,128)}', space=vmem, size = 0x14000, scoped, tag = 'scratch operand']
  #allocation4 [shape = 'f32[10,10,8]{2,1,0:T(8,128)}', space=vmem, size = 0x14000, scoped, tag = 'scratch operand']
  %s0 = inlined_call_operand.vmem [shape: f32[2,9,9,16], index: 0, kind: input, shape index: {}]
  %s1 = inlined_call_operand.vmem [shape: f32[36,4], index: 1, kind: input, shape index: {}]
  %s2 = inlined_call_operand.vmem [shape: f32[1,4], index: 2, kind: input, shape index: {}]
  %s3 = inlined_call_operand.vmem [shape: f32[36,4], index: 3, kind: input, shape index: {}]
  %s4 = inlined_call_operand.vmem [shape: f32[1,4], index: 4, kind: input, shape index: {}]
  %s5 = inlined_call_operand.vmem [shape: f32[36,8], index: 5, kind: input, shape index: {}]
  %s6 = inlined_call_operand.vmem [shape: f32[1,8], index: 6, kind: input, shape index: {}]
  %s7 = inlined_call_operand.hbm [shape: f32[2,4,4,8], index: 7, kind: output, shape index: {}]
  %s8 = sld [smem:[#allocation0]]
  $region61: #{tpu_custom_call.1} parent=0
    _
  %s10 = ssub.s32 1, %s8
  %s11 = scalar_select 0, %s10, %s8
  $region1: #{tpu_custom_call.1} parent=0
    #allocation5 [shape = 'u8[16384]{0}', space=vmem, size = 0x4000, scoped, tag = 'output window, operand 0']
    #allocation6 [shape = 's32[2]{0}', space=sflag, size = 0x8, scoped, tag = 'scoped memory for tpu_custom_call.1']
    %12 = vsyncpa [#allocation6], 0
    %s13 = scalar_lea.sflag [#allocation6], 1
    %14 = vsyncpa %s13, 0
    loop: start=0, step=1, limit=4
    $region2: #{tpu_custom_call.1} parent=1 // loop_pre_header
      _
    $region3: #{tpu_custom_call.1} parent=1 // loop_header
      %s16 = sphi 0, %s20
      %p17 = scmp.ge.s32.totalorder %s16, 4
      %s26 = sphi 0, %s28
      %s29 = sphi 0, %s26
      %s30 = sphi 0, %s29
      %s46 = sphi 0, %s30
      %s50 = sphi 0, %s50
      %s52 = sphi 0, %s50
      %s53 = sphi 0, %s52
      %s67 = sphi 0, %s53
      %s71 = sphi 0, %s71
      %s73 = sphi 0, %s71
      %s74 = sphi 0, %s73
      %s88 = sphi 0, %s74
      %s92 = sphi 0, %s92
      %s94 = sphi 0, %s92
      %s95 = sphi 0, %s94
      %s109 = sphi 0, %s95
      %s113 = sphi 0, %s113
      %s115 = sphi 0, %s113
      %s116 = sphi 0, %s115
      %s130 = sphi 0, %s116
      %s134 = sphi 0, %s134
      %s136 = sphi 0, %s134
      %s137 = sphi 0, %s136
      %s151 = sphi 0, %s137
      %s155 = sphi 0, %s155
      %s157 = sphi 0, %s155
      %s158 = sphi 0, %s157
      %s172 = sphi 0, %s158
      %s178 = sphi 0, %s180
      %s181 = sphi 0, %s178
      %s182 = sphi 0, %s181
      %s198 = sphi 0, %s182
    $region4: #{tpu_custom_call.1} parent=1 // loop_header_branch
      %19 = sbr.rel (%p17) target = $region8
    $region5: #{tpu_custom_call.1} parent=1 // loop_body
      %s21 = ssub.s32 %s16, 1
      %s22 = ssub.s32 %s16, 2
      %s23 = sadd.s32 %s16, 1
      %s24 = ssub.s32 %s16, %s23
      %p25 = scmp.eq.s32.totalorder %s24, 0
      %s27 = sadd.s32 %s26, 1
      %s28 = scalar_select %p25, %s26, %s27
      %p31 = pneg %p25
      %p32 = scmp.eq.s32.totalorder %s16, 1
      %p33 = por %p31, %p32
      %p34 = scmp.ne.s32.totalorder %s26, %s29
      %p35 = scmp.eq.s32.totalorder %s16, 0
      %p36 = por %p34, %p35
      %p37 = scmp.ne.s32.totalorder %s26, %s29
      %p38 = scmp.eq.s32.totalorder %s21, 1
      %p39 = por %p37, %p38
      %p40 = scmp.ne.s32.totalorder %s29, %s30
      %p41 = scmp.eq.s32.totalorder %s21, 0
      %p42 = por %p40, %p41
      %p43 = scmp.ne.s32.totalorder %s29, %s30
      %p44 = scmp.eq.s32.totalorder %s22, 1
      %p45 = por %p43, %p44
      %p47 = scmp.ne.s32.totalorder %s30, %s46
      %p48 = scmp.eq.s32.totalorder %s22, 0
      %p49 = por %p47, %p48
      %s51 = sadd.s32 %s50, 1
      %p54 = scmp.eq.s32.totalorder %s16, 1
      %p55 = scmp.ne.s32.totalorder %s50, %s52
      %p56 = scmp.eq.s32.totalorder %s16, 0
      %p57 = por %p55, %p56
      %p58 = scmp.ne.s32.totalorder %s50, %s52
      %p59 = scmp.eq.s32.totalorder %s21, 1
      %p60 = por %p58, %p59
      %p61 = scmp.ne.s32.totalorder %s52, %s53
      %p62 = scmp.eq.s32.totalorder %s21, 0
      %p63 = por %p61, %p62
      %p64 = scmp.ne.s32.totalorder %s52, %s53
      %p65 = scmp.eq.s32.totalorder %s22, 1
      %p66 = por %p64, %p65
      %p68 = scmp.ne.s32.totalorder %s53, %s67
      %p69 = scmp.eq.s32.totalorder %s22, 0
      %p70 = por %p68, %p69
      %s72 = sadd.s32 %s71, 1
      %p75 = scmp.eq.s32.totalorder %s16, 1
      %p76 = scmp.ne.s32.totalorder %s71, %s73
      %p77 = scmp.eq.s32.totalorder %s16, 0
      %p78 = por %p76, %p77
      %p79 = scmp.ne.s32.totalorder %s71, %s73
      %p80 = scmp.eq.s32.totalorder %s21, 1
      %p81 = por %p79, %p80
      %p82 = scmp.ne.s32.totalorder %s73, %s74
      %p83 = scmp.eq.s32.totalorder %s21, 0
      %p84 = por %p82, %p83
      %p85 = scmp.ne.s32.totalorder %s73, %s74
      %p86 = scmp.eq.s32.totalorder %s22, 1
      %p87 = por %p85, %p86
      %p89 = scmp.ne.s32.totalorder %s74, %s88
      %p90 = scmp.eq.s32.totalorder %s22, 0
      %p91 = por %p89, %p90
      %s93 = sadd.s32 %s92, 1
      %p96 = scmp.eq.s32.totalorder %s16, 1
      %p97 = scmp.ne.s32.totalorder %s92, %s94
      %p98 = scmp.eq.s32.totalorder %s16, 0
      %p99 = por %p97, %p98
      %p100 = scmp.ne.s32.totalorder %s92, %s94
      %p101 = scmp.eq.s32.totalorder %s21, 1
      %p102 = por %p100, %p101
      %p103 = scmp.ne.s32.totalorder %s94, %s95
      %p104 = scmp.eq.s32.totalorder %s21, 0
      %p105 = por %p103, %p104
      %p106 = scmp.ne.s32.totalorder %s94, %s95
      %p107 = scmp.eq.s32.totalorder %s22, 1
      %p108 = por %p106, %p107
      %p110 = scmp.ne.s32.totalorder %s95, %s109
      %p111 = scmp.eq.s32.totalorder %s22, 0
      %p112 = por %p110, %p111
      %s114 = sadd.s32 %s113, 1
      %p117 = scmp.eq.s32.totalorder %s16, 1
      %p118 = scmp.ne.s32.totalorder %s113, %s115
      %p119 = scmp.eq.s32.totalorder %s16, 0
      %p120 = por %p118, %p119
      %p121 = scmp.ne.s32.totalorder %s113, %s115
      %p122 = scmp.eq.s32.totalorder %s21, 1
      %p123 = por %p121, %p122
      %p124 = scmp.ne.s32.totalorder %s115, %s116
      %p125 = scmp.eq.s32.totalorder %s21, 0
      %p126 = por %p124, %p125
      %p127 = scmp.ne.s32.totalorder %s115, %s116
      %p128 = scmp.eq.s32.totalorder %s22, 1
      %p129 = por %p127, %p128
      %p131 = scmp.ne.s32.totalorder %s116, %s130
      %p132 = scmp.eq.s32.totalorder %s22, 0
      %p133 = por %p131, %p132
      %s135 = sadd.s32 %s134, 1
      %p138 = scmp.eq.s32.totalorder %s16, 1
      %p139 = scmp.ne.s32.totalorder %s134, %s136
      %p140 = scmp.eq.s32.totalorder %s16, 0
      %p141 = por %p139, %p140
      %p142 = scmp.ne.s32.totalorder %s134, %s136
      %p143 = scmp.eq.s32.totalorder %s21, 1
      %p144 = por %p142, %p143
      %p145 = scmp.ne.s32.totalorder %s136, %s137
      %p146 = scmp.eq.s32.totalorder %s21, 0
      %p147 = por %p145, %p146
      %p148 = scmp.ne.s32.totalorder %s136, %s137
      %p149 = scmp.eq.s32.totalorder %s22, 1
      %p150 = por %p148, %p149
      %p152 = scmp.ne.s32.totalorder %s137, %s151
      %p153 = scmp.eq.s32.totalorder %s22, 0
      %p154 = por %p152, %p153
      %s156 = sadd.s32 %s155, 1
      %p159 = scmp.eq.s32.totalorder %s16, 1
      %p160 = scmp.ne.s32.totalorder %s155, %s157
      %p161 = scmp.eq.s32.totalorder %s16, 0
      %p162 = por %p160, %p161
      %p163 = scmp.ne.s32.totalorder %s155, %s157
      %p164 = scmp.eq.s32.totalorder %s21, 1
      %p165 = por %p163, %p164
      %p166 = scmp.ne.s32.totalorder %s157, %s158
      %p167 = scmp.eq.s32.totalorder %s21, 0
      %p168 = por %p166, %p167
      %p169 = scmp.ne.s32.totalorder %s157, %s158
      %p170 = scmp.eq.s32.totalorder %s22, 1
      %p171 = por %p169, %p170
      %p173 = scmp.ne.s32.totalorder %s158, %s172
      %p174 = scmp.eq.s32.totalorder %s22, 0
      %p175 = por %p173, %p174
      %s176 = ssub.s32 %s16, %s23
      %p177 = scmp.eq.s32.totalorder %s176, 0
      %s179 = sadd.s32 %s178, 1
      %s180 = scalar_select %p177, %s178, %s179
      %p183 = pneg %p177
      %p184 = scmp.eq.s32.totalorder %s16, 1
      %p185 = por %p183, %p184
      %p186 = scmp.ne.s32.totalorder %s178, %s181
      %p187 = scmp.eq.s32.totalorder %s16, 0
      %p188 = por %p186, %p187
      %p189 = scmp.ne.s32.totalorder %s178, %s181
      %p190 = scmp.eq.s32.totalorder %s21, 1
      %p191 = por %p189, %p190
      %p192 = scmp.ne.s32.totalorder %s181, %s182
      %p193 = scmp.eq.s32.totalorder %s21, 0
      %p194 = por %p192, %p193
      %p195 = scmp.ne.s32.totalorder %s181, %s182
      %p196 = scmp.eq.s32.totalorder %s22, 1
      %p197 = por %p195, %p196
      %p199 = scmp.ne.s32.totalorder %s182, %s198
      %p200 = scmp.eq.s32.totalorder %s22, 0
      %p201 = por %p199, %p200
      %p202 = scmp.le.s32.totalorder 1, %s16
      %p203 = scmp.lt.s32.totalorder %s16, 3
      %p204 = pnand %p202, %p203
      %p205 = pneg %p204
      // Predicated region
      $region9: #{tpu_custom_call.1} parent=5 // pred_check
        _
      $region10: #{tpu_custom_call.1} parent=5 // pred_check_branch
        %207 = sbr.rel (%p204) target = $region12
      $region11: #{tpu_custom_call.1} parent=5 // pred_region
        %s208 = ssub.s32 %s16, 1
        // Predicated region
        $region13: #{tpu_custom_call.1} parent=11 // pred_check
          %p209 = pneg %p63
        $region14: #{tpu_custom_call.1} parent=11 // pred_check_branch
          %211 = sbr.rel (%p209) target = $region16
        $region15: #{tpu_custom_call.1} parent=11 // pred_region
          _
        $region16: #{tpu_custom_call.1} parent=11 // pred_fallthru
          _
        // Predicated region
        $region17: #{tpu_custom_call.1} parent=11 // pred_check
          %p212 = pneg %p84
        $region18: #{tpu_custom_call.1} parent=11 // pred_check_branch
          %214 = sbr.rel (%p212) target = $region20
        $region19: #{tpu_custom_call.1} parent=11 // pred_region
          _
        $region20: #{tpu_custom_call.1} parent=11 // pred_fallthru
          _
        // Predicated region
        $region21: #{tpu_custom_call.1} parent=11 // pred_check
          %p215 = pneg %p105
        $region22: #{tpu_custom_call.1} parent=11 // pred_check_branch
          %217 = sbr.rel (%p215) target = $region24
        $region23: #{tpu_custom_call.1} parent=11 // pred_region
          _
        $region24: #{tpu_custom_call.1} parent=11 // pred_fallthru
          _
        // Predicated region
        $region25: #{tpu_custom_call.1} parent=11 // pred_check
          %p218 = pneg %p126
        $region26: #{tpu_custom_call.1} parent=11 // pred_check_branch
          %220 = sbr.rel (%p218) target = $region28
        $region27: #{tpu_custom_call.1} parent=11 // pred_region
          _
        $region28: #{tpu_custom_call.1} parent=11 // pred_fallthru
          _
        // Predicated region
        $region29: #{tpu_custom_call.1} parent=11 // pred_check
          %p221 = pneg %p147
        $region30: #{tpu_custom_call.1} parent=11 // pred_check_branch
          %223 = sbr.rel (%p221) target = $region32
        $region31: #{tpu_custom_call.1} parent=11 // pred_region
          _
        $region32: #{tpu_custom_call.1} parent=11 // pred_fallthru
          _
        // Predicated region
        $region33: #{tpu_custom_call.1} parent=11 // pred_check
          %p224 = pneg %p168
        $region34: #{tpu_custom_call.1} parent=11 // pred_check_branch
          %226 = sbr.rel (%p224) target = $region36
        $region35: #{tpu_custom_call.1} parent=11 // pred_region
          _
        $region36: #{tpu_custom_call.1} parent=11 // pred_fallthru
          _
      $region12: #{tpu_custom_call.1} parent=5 // pred_fallthru
        _
      %p227 = scmp.lt.s32.totalorder %s16, 2
      // Predicated region
      $region37: #{tpu_custom_call.1} parent=5 // pred_check
        %p228 = pneg %p227
      $region38: #{tpu_custom_call.1} parent=5 // pred_check_branch
        %230 = sbr.rel (%p228) target = $region40
      $region39: #{tpu_custom_call.1} parent=5 // pred_region
        // Predicated region
        $region41: #{tpu_custom_call.1} parent=39 // pred_check
          %p231 = pneg %p36
        $region42: #{tpu_custom_call.1} parent=39 // pred_check_branch
          %233 = sbr.rel (%p231) target = $region44
        $region43: #{tpu_custom_call.1} parent=39 // pred_region
          %p234 = scmp.lt.s32.totalorder %s16, 1
          %s235 = scalar_select %p234, %s16, 1
          %s236 = smul.addr %s235, 18
          %s237 = smul.addr %s236, 8
          %s238 = scalar_lea.vmem %s0, %s237
        $region44: #{tpu_custom_call.1} parent=39 // pred_fallthru
          _
      $region40: #{tpu_custom_call.1} parent=5 // pred_fallthru
        _
      %p239 = scmp.le.s32.totalorder 1, %s16
      %p240 = scmp.lt.s32.totalorder %s16, 3
      %p241 = pnand %p239, %p240
      %p242 = pneg %p241
      // Predicated region
      $region45: #{tpu_custom_call.1} parent=5 // pred_check
        _
      $region46: #{tpu_custom_call.1} parent=5 // pred_check_branch
        %244 = sbr.rel (%p241) target = $region48
      $region47: #{tpu_custom_call.1} parent=5 // pred_region
        %s245 = ssub.s32 %s16, 1
        %p246 = scmp.lt.s32.totalorder %s21, 1
        %s247 = scalar_select %p246, %s21, 1
        %s248 = smul.addr %s247, 18
        %s249 = smul.addr %s248, 8
        %s250 = scalar_lea.vmem %s0, %s249
        %p251 = pneg %p42
        %p252 = pneg %p39
        %p253 = pneg %p63
        %p254 = pneg %p60
        %p255 = pneg %p84
        %p256 = pneg %p81
        %p257 = pneg %p105
        %p258 = pneg %p102
        %p259 = pneg %p126
        %p260 = pneg %p123
        %p261 = pneg %p147
        %p262 = pneg %p144
        %p263 = pneg %p168
        %p264 = pneg %p165
        %p265 = pneg %p194
        %p266 = pneg %p191
        %s267 = sand.u32 %s181, 1
        %s268 = scalar_lea.sflag [#allocation6], %s267
        %s269 = sand.u32 %s181, 1
        %s270 = smul.addr %s269, 16
        %s271 = scalar_lea.vmem [#allocation5], %s270
        %p272 = scmp.lt.s32.totalorder %s21, 1
        %s273 = scalar_select %p272, %s21, 1
        %s274 = smul.addr %s273, 18
        %s275 = smul.addr %s274, 8
        %s276 = scalar_lea.vmem %s0, %s275
        %v277 = vld [vmem:[%s276] sm:$0xff]
        %v278 = vld [vmem:[%s276 + $0x8] sm:$0x1]
        %v279 = vld [vmem:[%s276 + $0x10] sm:$0xff]
        %v280 = vld [vmem:[%s276 + $0x18] sm:$0x1]
        %v281 = vld [vmem:[%s276 + $0x20] sm:$0xff]
        %v282 = vld [vmem:[%s276 + $0x28] sm:$0x1]
        %v283 = vld [vmem:[%s276 + $0x30] sm:$0xff]
        %v284 = vld [vmem:[%s276 + $0x38] sm:$0x1]
        %v285 = vld [vmem:[%s276 + $0x40] sm:$0xff]
        %v286 = vld [vmem:[%s276 + $0x48] sm:$0x1]
        %v287 = vld [vmem:[%s276 + $0x50] sm:$0xff]
        %v288 = vld [vmem:[%s276 + $0x58] sm:$0x1]
        %v289 = vld [vmem:[%s276 + $0x60] sm:$0xff]
        %v290 = vld [vmem:[%s276 + $0x68] sm:$0x1]
        %v291 = vld [vmem:[%s276 + $0x70] sm:$0xff]
        %v292 = vld [vmem:[%s276 + $0x78] sm:$0x1]
        %v293 = vld [vmem:[%s276 + $0x80] sm:$0xff]
        %v294 = vld [vmem:[%s276 + $0x88] sm:$0x1]
        %vm311 = vcmask 1046528
        %v312 = vrot.slane %v277, 1
        %v313 = vrot.slane %v278, 1
        %v314 = vsel %vm311, %v312, %v313
        %v315 = vrot.slane %v279, 1
        %v316 = vrot.slane %v280, 1
        %v317 = vsel %vm311, %v315, %v316
        %v318 = vrot.slane %v281, 1
        %v319 = vrot.slane %v282, 1
        %v320 = vsel %vm311, %v318, %v319
        %v321 = vrot.slane %v283, 1
        %v322 = vrot.slane %v284, 1
        %v323 = vsel %vm311, %v321, %v322
        %v324 = vrot.slane %v285, 1
        %v325 = vrot.slane %v286, 1
        %v326 = vsel %vm311, %v324, %v325
        %v327 = vrot.slane %v287, 1
        %v328 = vrot.slane %v288, 1
        %v329 = vsel %vm311, %v327, %v328
        %v330 = vrot.slane %v289, 1
        %v331 = vrot.slane %v290, 1
        %v332 = vsel %vm311, %v330, %v331
        %v333 = vrot.slane %v291, 1
        %v334 = vrot.slane %v292, 1
        %v335 = vsel %vm311, %v333, %v334
        %336 = vrot.lane.b32.xlu0 %v314, 8
        %v337 = vpop.permute.xlu0 %336
        %338 = vrot.lane.b32.xlu0 %v317, 8
        %v339 = vpop.permute.xlu0 %338
        %340 = vrot.lane.b32.xlu0 %v320, 8
        %v341 = vpop.permute.xlu0 %340
        %342 = vrot.lane.b32.xlu0 %v323, 8
        %v343 = vpop.permute.xlu0 %342
        %344 = vrot.lane.b32.xlu0 %v326, 8
        %v345 = vpop.permute.xlu0 %344
        %346 = vrot.lane.b32.xlu0 %v329, 8
        %v347 = vpop.permute.xlu0 %346
        %348 = vrot.lane.b32.xlu0 %v332, 8
        %v349 = vpop.permute.xlu0 %348
        %350 = vrot.lane.b32.xlu0 %v335, 8
        %v351 = vpop.permute.xlu0 %350
        %360 = vrot.lane.b32.xlu0 %v277, 4
        %v361 = vpop.permute.xlu0 %360
        %362 = vrot.lane.b32.xlu0 %v279, 4
        %v363 = vpop.permute.xlu0 %362
        %364 = vrot.lane.b32.xlu0 %v281, 4
        %v365 = vpop.permute.xlu0 %364
        %366 = vrot.lane.b32.xlu0 %v283, 4
        %v367 = vpop.permute.xlu0 %366
        %368 = vrot.lane.b32.xlu0 %v285, 4
        %v369 = vpop.permute.xlu0 %368
        %370 = vrot.lane.b32.xlu0 %v287, 4
        %v371 = vpop.permute.xlu0 %370
        %372 = vrot.lane.b32.xlu0 %v289, 4
        %v373 = vpop.permute.xlu0 %372
        %374 = vrot.lane.b32.xlu0 %v291, 4
        %v375 = vpop.permute.xlu0 %374
        %384 = vrot.lane.b32.xlu0 %v314, 12
        %v385 = vpop.permute.xlu0 %384
        %386 = vrot.lane.b32.xlu0 %v317, 12
        %v387 = vpop.permute.xlu0 %386
        %388 = vrot.lane.b32.xlu0 %v320, 12
        %v389 = vpop.permute.xlu0 %388
        %390 = vrot.lane.b32.xlu0 %v323, 12
        %v391 = vpop.permute.xlu0 %390
        %392 = vrot.lane.b32.xlu0 %v326, 12
        %v393 = vpop.permute.xlu0 %392
        %394 = vrot.lane.b32.xlu0 %v329, 12
        %v395 = vpop.permute.xlu0 %394
        %396 = vrot.lane.b32.xlu0 %v332, 12
        %v397 = vpop.permute.xlu0 %396
        %398 = vrot.lane.b32.xlu0 %v335, 12
        %v399 = vpop.permute.xlu0 %398
        %409 = vrot.lane.b32.xlu0 %v279, 24
        %v410 = vpop.permute.xlu0 %409
        %411 = vrot.lane.b32.xlu0 %v281, 24
        %v412 = vpop.permute.xlu0 %411
        %413 = vrot.lane.b32.xlu0 %v283, 24
        %v414 = vpop.permute.xlu0 %413
        %415 = vrot.lane.b32.xlu0 %v285, 24
        %v416 = vpop.permute.xlu0 %415
        %417 = vrot.lane.b32.xlu0 %v287, 24
        %v418 = vpop.permute.xlu0 %417
        %419 = vrot.lane.b32.xlu0 %v289, 24
        %v420 = vpop.permute.xlu0 %419
        %421 = vrot.lane.b32.xlu0 %v291, 24
        %v422 = vpop.permute.xlu0 %421
        %423 = vrot.lane.b32.xlu0 %v293, 24
        %v424 = vpop.permute.xlu0 %423
        %v434 = vrot.slane %v293, 1
        %v435 = vrot.slane %v294, 1
        %v436 = vsel %vm311, %v434, %v435
        %437 = vrot.lane.b32.xlu0 %v317, 32
        %v438 = vpop.permute.xlu0 %437
        %439 = vrot.lane.b32.xlu0 %v320, 32
        %v440 = vpop.permute.xlu0 %439
        %441 = vrot.lane.b32.xlu0 %v323, 32
        %v442 = vpop.permute.xlu0 %441
        %443 = vrot.lane.b32.xlu0 %v326, 32
        %v444 = vpop.permute.xlu0 %443
        %445 = vrot.lane.b32.xlu0 %v329, 32
        %v446 = vpop.permute.xlu0 %445
        %447 = vrot.lane.b32.xlu0 %v332, 32
        %v448 = vpop.permute.xlu0 %447
        %449 = vrot.lane.b32.xlu0 %v335, 32
        %v450 = vpop.permute.xlu0 %449
        %451 = vrot.lane.b32.xlu0 %v436, 32
        %v452 = vpop.permute.xlu0 %451
        %vm461 = vcmask 64512
        %v462 = vsel %vm461, %v277, %v337
        %v463 = vsel %vm461, %v279, %v339
        %v464 = vsel %vm461, %v281, %v341
        %v465 = vsel %vm461, %v283, %v343
        %v466 = vsel %vm461, %v285, %v345
        %v467 = vsel %vm461, %v287, %v347
        %v468 = vsel %vm461, %v289, %v349
        %v469 = vsel %vm461, %v291, %v351
        %vm470 = vcmask 97280
        %v471 = vsel %vm470, %v462, %v361
        %v472 = vsel %vm470, %v463, %v363
        %v473 = vsel %vm470, %v464, %v365
        %v474 = vsel %vm470, %v465, %v367
        %v475 = vsel %vm470, %v466, %v369
        %v476 = vsel %vm470, %v467, %v371
        %v477 = vsel %vm470, %v468, %v373
        %v478 = vsel %vm470, %v469, %v375
        %vm479 = vcmask 130048
        %v480 = vsel %vm479, %v471, %v361
        %v481 = vsel %vm479, %v472, %v363
        %v482 = vsel %vm479, %v473, %v365
        %v483 = vsel %vm479, %v474, %v367
        %v484 = vsel %vm479, %v475, %v369
        %v485 = vsel %vm479, %v476, %v371
        %v486 = vsel %vm479, %v477, %v373
        %v487 = vsel %vm479, %v478, %v375
        %vm488 = vcmask 162816
        %v489 = vsel %vm488, %v480, %v385
        %v490 = vsel %vm488, %v481, %v387
        %v491 = vsel %vm488, %v482, %v389
        %v492 = vsel %vm488, %v483, %v391
        %v493 = vsel %vm488, %v484, %v393
        %v494 = vsel %vm488, %v485, %v395
        %v495 = vsel %vm488, %v486, %v397
        %v496 = vsel %vm488, %v487, %v399
        %vm497 = vcmask 195584
        %v498 = vsel %vm497, %v489, %v410
        %v499 = vsel %vm497, %v490, %v412
        %v500 = vsel %vm497, %v491, %v414
        %v501 = vsel %vm497, %v492, %v416
        %v502 = vsel %vm497, %v493, %v418
        %v503 = vsel %vm497, %v494, %v420
        %v504 = vsel %vm497, %v495, %v422
        %v505 = vsel %vm497, %v496, %v424
        %vm506 = vcmask 228352
        %v507 = vsel %vm506, %v498, %v410
        %v508 = vsel %vm506, %v499, %v412
        %v509 = vsel %vm506, %v500, %v414
        %v510 = vsel %vm506, %v501, %v416
        %v511 = vsel %vm506, %v502, %v418
        %v512 = vsel %vm506, %v503, %v420
        %v513 = vsel %vm506, %v504, %v422
        %v514 = vsel %vm506, %v505, %v424
        %vm515 = vcmask 261120
        %v516 = vsel %vm515, %v507, %v438
        %v517 = vsel %vm515, %v508, %v440
        %v518 = vsel %vm515, %v509, %v442
        %v519 = vsel %vm515, %v510, %v444
        %v520 = vsel %vm515, %v511, %v446
        %v521 = vsel %vm515, %v512, %v448
        %v522 = vsel %vm515, %v513, %v450
        %v523 = vsel %vm515, %v514, %v452
        %v524 = vld [vmem:[%s1] sm:$0xff]
        %v525 = vld [vmem:[%s1 + $0x8] sm:$0xff]
        %v526 = vld [vmem:[%s1 + $0x10] sm:$0xff]
        %v527 = vld [vmem:[%s1 + $0x18] sm:$0xff]
        %v528 = vld [vmem:[%s1 + $0x20] sm:$0xf]
        %v529 = vld [vmem:[%s2] sm:$0x1]
        %v531 = vlaneseq
        %v532 = vshrl.u32 %v531, 7
        %v533 = vsub.s32 0, %v532
        %v534 = vrot.slane %v529, %v533
        %vm536 = vcmask 293888
        %v538 = vsel %vm536, %v516, 0
        %v541 = vsel %vm536, %v517, 0
        %v544 = vsel %vm536, %v518, 0
        %v547 = vsel %vm536, %v519, 0
        %v550 = vsel %vm536, %v520, 0
        %v553 = vsel %vm536, %v521, 0
        %v556 = vsel %vm536, %v522, 0
        %v559 = vsel %vm536, %v523, 0
        %vm561 = vcmask 1043456
        %v563 = vsel %vm561, %v528, 0
        %565 = vmatprep.subr.mxu0 0.0
        %566 = vmatpush1.msra.mxu0 %v524
        %567 = vmatprep.subr.mxu0 0.0
        %568 = vmatpush1.msra.mxu0 %v525
        %569 = vmatprep.subr.mxu0 0.0
        %570 = vmatpush1.msra.mxu0 %v526
        %571 = vmatprep.subr.mxu0 0.0
        %572 = vmatpush1.msra.mxu0 %v527
        %573 = vmatprep.subr.mxu0 0.0
        %574 = vmatpush1.msra.mxu0 %v563
        %575 = vmatprep.subr.mxu0 0.0
        %576 = vmatpush1.msra.mxu0 0.0
        %577 = vmatprep.subr.mxu0 0.0
        %578 = vmatpush1.msra.mxu0 0.0
        %579 = vmatprep.subr.mxu0 0.0
        %580 = vmatpush1.msra.mxu0 0.0
        %581 = vmatprep.subr.mxu0 0.0
        %582 = vmatpush1.msra.mxu0 0.0
        %583 = vmatprep.subr.mxu0 0.0
        %584 = vmatpush1.msra.mxu0 0.0
        %585 = vmatprep.subr.mxu0 0.0
        %586 = vmatpush1.msra.mxu0 0.0
        %587 = vmatprep.subr.mxu0 0.0
        %588 = vmatpush1.msra.mxu0 0.0
        %589 = vmatprep.subr.mxu0 0.0
        %590 = vmatpush1.msra.mxu0 0.0
        %591 = vmatprep.subr.mxu0 0.0
        %592 = vmatpush1.msra.mxu0 0.0
        %593 = vmatprep.subr.mxu0 0.0
        %594 = vmatpush1.msra.mxu0 0.0
        %595 = vmatprep.subr.mxu0 0.0
        %596 = vmatpush1.msra.mxu0 0.0
        %597 = vmatprep.subr.mxu0 0.0
        %598 = vmatpush1.msra.mxu0 0.0
        %599 = vmatprep.subr.mxu0 0.0
        %600 = vmatpush1.msra.mxu0 0.0
        %601 = vmatprep.subr.mxu0 0.0
        %602 = vmatpush1.msra.mxu0 0.0
        %603 = vmatprep.subr.mxu0 0.0
        %604 = vmatpush1.msra.mxu0 0.0
        %605 = vmatprep.subr.mxu0 0.0
        %606 = vmatpush1.msra.mxu0 0.0
        %607 = vmatprep.subr.mxu0 0.0
        %608 = vmatpush1.msra.mxu0 0.0
        %609 = vmatprep.subr.mxu0 0.0
        %610 = vmatpush1.msra.mxu0 0.0
        %611 = vmatprep.subr.mxu0 0.0
        %612 = vmatpush1.msra.mxu0 0.0
        %613 = vmatprep.subr.mxu0 0.0
        %614 = vmatpush1.msra.mxu0 0.0
        %615 = vmatprep.subr.mxu0 0.0
        %616 = vmatpush1.msra.mxu0 0.0
        %617 = vmatprep.subr.mxu0 0.0
        %618 = vmatpush1.msra.mxu0 0.0
        %619 = vmatprep.subr.mxu0 0.0
        %620 = vmatpush1.msra.mxu0 0.0
        %621 = vmatprep.subr.mxu0 0.0
        %622 = vmatpush1.msra.mxu0 0.0
        %623 = vmatprep.subr.mxu0 0.0
        %624 = vmatpush1.msra.mxu0 0.0
        %625 = vmatprep.subr.mxu0 0.0
        %626 = vmatpush1.msra.mxu0 0.0
        %627 = vmatprep.subr.mxu0 0.0
        %628 = vmatpush1.msra.mxu0 0.0
        %629 = vmatprep.mubr.f32.mxu0 0.0
        %630 = vmatmul.mubr.f32.gmra.mrb[0].mxu0 %v538
        %v631 = vpop.f32.mrb[0].mxu0
        %v632 = vadd.f32 %v534, %v631
        %v633 = vpop.f32.mrb[0].mxu0
        %634 = vmatprep.mubr.f32.mxu0 0.0
        %635 = vmatmul.mubr.f32.gmra.mrb[0].mxu0 %v541
        %v636 = vpop.f32.mrb[0].mxu0
        %v637 = vadd.f32 %v534, %v636
        %v638 = vpop.f32.mrb[0].mxu0
        %639 = vmatprep.mubr.f32.mxu0 0.0
        %640 = vmatmul.mubr.f32.gmra.mrb[0].mxu0 %v544
        %v641 = vpop.f32.mrb[0].mxu0
        %v642 = vadd.f32 %v534, %v641
        %v643 = vpop.f32.mrb[0].mxu0
        %644 = vmatprep.mubr.f32.mxu0 0.0
        %645 = vmatmul.mubr.f32.gmra.mrb[0].mxu0 %v547
        %v646 = vpop.f32.mrb[0].mxu0
        %v647 = vadd.f32 %v534, %v646
        %v648 = vpop.f32.mrb[0].mxu0
        %649 = vmatprep.mubr.f32.mxu0 0.0
        %650 = vmatmul.mubr.f32.gmra.mrb[0].mxu0 %v550
        %v651 = vpop.f32.mrb[0].mxu0
        %v652 = vadd.f32 %v534, %v651
        %v653 = vpop.f32.mrb[0].mxu0
        %654 = vmatprep.mubr.f32.mxu0 0.0
        %655 = vmatmul.mubr.f32.gmra.mrb[0].mxu0 %v553
        %v656 = vpop.f32.mrb[0].mxu0
        %v657 = vadd.f32 %v534, %v656
        %v658 = vpop.f32.mrb[0].mxu0
        %659 = vmatprep.mubr.f32.mxu0 0.0
        %660 = vmatmul.mubr.f32.gmra.mrb[0].mxu0 %v556
        %v661 = vpop.f32.mrb[0].mxu0
        %v662 = vadd.f32 %v534, %v661
        %v663 = vpop.f32.mrb[0].mxu0
        %664 = vmatprep.mubr.f32.mxu0 0.0
        %665 = vmatmul.mubr.f32.gmra.mrb[0].mxu0 %v559
        %v666 = vpop.f32.mrb[0].mxu0
        %v667 = vadd.f32 %v534, %v666
        %v668 = vpop.f32.mrb[0].mxu0
        %669 = vdwg.mxu0
        %vm670 = vcmask 31744
        %671 = vst.msk [vmem:[#allocation2] sm:$0xff] %vm670, 0.0
        %vm672 = vcmask 25600
        %673 = vst.msk [vmem:[#allocation2 + $0x8] sm:$0x3] %vm672, 0.0
        %674 = vst.msk [vmem:[#allocation2 + $0x10] sm:$0xff] %vm670, 0.0
        %675 = vst.msk [vmem:[#allocation2 + $0x18] sm:$0x3] %vm672, 0.0
        %676 = vst.msk [vmem:[#allocation2 + $0x20] sm:$0xff] %vm670, 0.0
        %677 = vst.msk [vmem:[#allocation2 + $0x28] sm:$0x3] %vm672, 0.0
        %678 = vst.msk [vmem:[#allocation2 + $0x30] sm:$0xff] %vm670, 0.0
        %679 = vst.msk [vmem:[#allocation2 + $0x38] sm:$0x3] %vm672, 0.0
        %680 = vst.msk [vmem:[#allocation2 + $0x40] sm:$0xff] %vm670, 0.0
        %681 = vst.msk [vmem:[#allocation2 + $0x48] sm:$0x3] %vm672, 0.0
        %682 = vst.msk [vmem:[#allocation2 + $0x50] sm:$0xff] %vm670, 0.0
        %683 = vst.msk [vmem:[#allocation2 + $0x58] sm:$0x3] %vm672, 0.0
        %684 = vst.msk [vmem:[#allocation2 + $0x60] sm:$0xff] %vm670, 0.0
        %685 = vst.msk [vmem:[#allocation2 + $0x68] sm:$0x3] %vm672, 0.0
        %686 = vst.msk [vmem:[#allocation2 + $0x70] sm:$0xff] %vm670, 0.0
        %687 = vst.msk [vmem:[#allocation2 + $0x78] sm:$0x3] %vm672, 0.0
        %688 = vst.msk [vmem:[#allocation2 + $0x80] sm:$0xff] %vm670, 0.0
        %689 = vst.msk [vmem:[#allocation2 + $0x88] sm:$0x3] %vm672, 0.0
        %690 = vst.msk [vmem:[#allocation2 + $0x90] sm:$0xff] %vm670, 0.0
        %691 = vst.msk [vmem:[#allocation2 + $0x98] sm:$0x3] %vm672, 0.0
        %s692 = scalar_lea.vmem [#allocation2], 16
        %693 = vst.msk [vmem:[%s692 + $0x1] sm:$0xff] %vm670, %v632
        %694 = vst.msk [vmem:[%s692 + $0x11] sm:$0xff] %vm670, %v637
        %695 = vst.msk [vmem:[%s692 + $0x21] sm:$0xff] %vm670, %v642
        %696 = vst.msk [vmem:[%s692 + $0x31] sm:$0xff] %vm670, %v647
        %697 = vst.msk [vmem:[%s692 + $0x41] sm:$0xff] %vm670, %v652
        %698 = vst.msk [vmem:[%s692 + $0x51] sm:$0xff] %vm670, %v657
        %699 = vst.msk [vmem:[%s692 + $0x61] sm:$0xff] %vm670, %v662
        %700 = vst.msk [vmem:[%s692 + $0x71] sm:$0xff] %vm670, %v667
        %v701 = vld [vmem:[#allocation2] sm:$0xff]
        %v702 = vld [vmem:[#allocation2 + $0x8] sm:$0x3]
        %v703 = vld [vmem:[#allocation2 + $0x10] sm:$0xff]
        %v704 = vld [vmem:[#allocation2 + $0x18] sm:$0x3]
        %v705 = vld [vmem:[#allocation2 + $0x20] sm:$0xff]
        %v706 = vld [vmem:[#allocation2 + $0x28] sm:$0x3]
        %v707 = vld [vmem:[#allocation2 + $0x30] sm:$0xff]
        %v708 = vld [vmem:[#allocation2 + $0x38] sm:$0x3]
        %v709 = vld [vmem:[#allocation2 + $0x40] sm:$0xff]
        %v710 = vld [vmem:[#allocation2 + $0x48] sm:$0x3]
        %v711 = vld [vmem:[#allocation2 + $0x50] sm:$0xff]
        %v712 = vld [vmem:[#allocation2 + $0x58] sm:$0x3]
        %v713 = vld [vmem:[#allocation2 + $0x60] sm:$0xff]
        %v714 = vld [vmem:[#allocation2 + $0x68] sm:$0x3]
        %v715 = vld [vmem:[#allocation2 + $0x70] sm:$0xff]
        %v716 = vld [vmem:[#allocation2 + $0x78] sm:$0x3]
        %v717 = vld [vmem:[#allocation2 + $0x80] sm:$0xff]
        %v718 = vld [vmem:[#allocation2 + $0x88] sm:$0x3]
        %v719 = vld [vmem:[#allocation2 + $0x90] sm:$0xff]
        %v720 = vld [vmem:[#allocation2 + $0x98] sm:$0x3]
        %v737 = vrot.slane %v701, 1
        %v738 = vrot.slane %v702, 1
        %v739 = vsel %vm311, %v737, %v738
        %v740 = vrot.slane %v703, 1
        %v741 = vrot.slane %v704, 1
        %v742 = vsel %vm311, %v740, %v741
        %v743 = vrot.slane %v705, 1
        %v744 = vrot.slane %v706, 1
        %v745 = vsel %vm311, %v743, %v744
        %v746 = vrot.slane %v707, 1
        %v747 = vrot.slane %v708, 1
        %v748 = vsel %vm311, %v746, %v747
        %v749 = vrot.slane %v709, 1
        %v750 = vrot.slane %v710, 1
        %v751 = vsel %vm311, %v749, %v750
        %v752 = vrot.slane %v711, 1
        %v753 = vrot.slane %v712, 1
        %v754 = vsel %vm311, %v752, %v753
        %v755 = vrot.slane %v713, 1
        %v756 = vrot.slane %v714, 1
        %v757 = vsel %vm311, %v755, %v756
        %v758 = vrot.slane %v715, 1
        %v759 = vrot.slane %v716, 1
        %v760 = vsel %vm311, %v758, %v759
        %761 = vrot.lane.b32.xlu0 %v739, 4
        %v762 = vpop.permute.xlu0 %761
        %763 = vrot.lane.b32.xlu0 %v742, 4
        %v764 = vpop.permute.xlu0 %763
        %765 = vrot.lane.b32.xlu0 %v745, 4
        %v766 = vpop.permute.xlu0 %765
        %767 = vrot.lane.b32.xlu0 %v748, 4
        %v768 = vpop.permute.xlu0 %767
        %769 = vrot.lane.b32.xlu0 %v751, 4
        %v770 = vpop.permute.xlu0 %769
        %771 = vrot.lane.b32.xlu0 %v754, 4
        %v772 = vpop.permute.xlu0 %771
        %773 = vrot.lane.b32.xlu0 %v757, 4
        %v774 = vpop.permute.xlu0 %773
        %775 = vrot.lane.b32.xlu0 %v760, 4
        %v776 = vpop.permute.xlu0 %775
        %vm785 = vcmask 1045504
        %v786 = vrot.slane %v701, 2
        %v787 = vrot.slane %v702, 2
        %v788 = vsel %vm785, %v786, %v787
        %v789 = vrot.slane %v703, 2
        %v790 = vrot.slane %v704, 2
        %v791 = vsel %vm785, %v789, %v790
        %v792 = vrot.slane %v705, 2
        %v793 = vrot.slane %v706, 2
        %v794 = vsel %vm785, %v792, %v793
        %v795 = vrot.slane %v707, 2
        %v796 = vrot.slane %v708, 2
        %v797 = vsel %vm785, %v795, %v796
        %v798 = vrot.slane %v709, 2
        %v799 = vrot.slane %v710, 2
        %v800 = vsel %vm785, %v798, %v799
        %v801 = vrot.slane %v711, 2
        %v802 = vrot.slane %v712, 2
        %v803 = vsel %vm785, %v801, %v802
        %v804 = vrot.slane %v713, 2
        %v805 = vrot.slane %v714, 2
        %v806 = vsel %vm785, %v804, %v805
        %v807 = vrot.slane %v715, 2
        %v808 = vrot.slane %v716, 2
        %v809 = vsel %vm785, %v807, %v808
        %810 = vrot.lane.b32.xlu0 %v788, 8
        %v811 = vpop.permute.xlu0 %810
        %812 = vrot.lane.b32.xlu0 %v791, 8
        %v813 = vpop.permute.xlu0 %812
        %814 = vrot.lane.b32.xlu0 %v794, 8
        %v815 = vpop.permute.xlu0 %814
        %816 = vrot.lane.b32.xlu0 %v797, 8
        %v817 = vpop.permute.xlu0 %816
        %818 = vrot.lane.b32.xlu0 %v800, 8
        %v819 = vpop.permute.xlu0 %818
        %820 = vrot.lane.b32.xlu0 %v803, 8
        %v821 = vpop.permute.xlu0 %820
        %822 = vrot.lane.b32.xlu0 %v806, 8
        %v823 = vpop.permute.xlu0 %822
        %824 = vrot.lane.b32.xlu0 %v809, 8
        %v825 = vpop.permute.xlu0 %824
        %835 = vrot.lane.b32.xlu0 %v703, 12
        %v836 = vpop.permute.xlu0 %835
        %837 = vrot.lane.b32.xlu0 %v705, 12
        %v838 = vpop.permute.xlu0 %837
        %839 = vrot.lane.b32.xlu0 %v707, 12
        %v840 = vpop.permute.xlu0 %839
        %841 = vrot.lane.b32.xlu0 %v709, 12
        %v842 = vpop.permute.xlu0 %841
        %843 = vrot.lane.b32.xlu0 %v711, 12
        %v844 = vpop.permute.xlu0 %843
        %845 = vrot.lane.b32.xlu0 %v713, 12
        %v846 = vpop.permute.xlu0 %845
        %847 = vrot.lane.b32.xlu0 %v715, 12
        %v848 = vpop.permute.xlu0 %847
        %849 = vrot.lane.b32.xlu0 %v717, 12
        %v850 = vpop.permute.xlu0 %849
        %v860 = vrot.slane %v717, 1
        %v861 = vrot.slane %v718, 1
        %v862 = vsel %vm311, %v860, %v861
        %863 = vrot.lane.b32.xlu0 %v742, 16
        %v864 = vpop.permute.xlu0 %863
        %865 = vrot.lane.b32.xlu0 %v745, 16
        %v866 = vpop.permute.xlu0 %865
        %867 = vrot.lane.b32.xlu0 %v748, 16
        %v868 = vpop.permute.xlu0 %867
        %869 = vrot.lane.b32.xlu0 %v751, 16
        %v870 = vpop.permute.xlu0 %869
        %871 = vrot.lane.b32.xlu0 %v754, 16
        %v872 = vpop.permute.xlu0 %871
        %873 = vrot.lane.b32.xlu0 %v757, 16
        %v874 = vpop.permute.xlu0 %873
        %875 = vrot.lane.b32.xlu0 %v760, 16
        %v876 = vpop.permute.xlu0 %875
        %877 = vrot.lane.b32.xlu0 %v862, 16
        %v878 = vpop.permute.xlu0 %877
        %v887 = vrot.slane %v717, 2
        %v888 = vrot.slane %v718, 2
        %v889 = vsel %vm785, %v887, %v888
        %890 = vrot.lane.b32.xlu0 %v791, 20
        %v891 = vpop.permute.xlu0 %890
        %892 = vrot.lane.b32.xlu0 %v794, 20
        %v893 = vpop.permute.xlu0 %892
        %894 = vrot.lane.b32.xlu0 %v797, 20
        %v895 = vpop.permute.xlu0 %894
        %896 = vrot.lane.b32.xlu0 %v800, 20
        %v897 = vpop.permute.xlu0 %896
        %898 = vrot.lane.b32.xlu0 %v803, 20
        %v899 = vpop.permute.xlu0 %898
        %900 = vrot.lane.b32.xlu0 %v806, 20
        %v901 = vpop.permute.xlu0 %900
        %902 = vrot.lane.b32.xlu0 %v809, 20
        %v903 = vpop.permute.xlu0 %902
        %904 = vrot.lane.b32.xlu0 %v889, 20
        %v905 = vpop.permute.xlu0 %904
        %915 = vrot.lane.b32.xlu0 %v705, 24
        %v916 = vpop.permute.xlu0 %915
        %917 = vrot.lane.b32.xlu0 %v707, 24
        %v918 = vpop.permute.xlu0 %917
        %919 = vrot.lane.b32.xlu0 %v709, 24
        %v920 = vpop.permute.xlu0 %919
        %921 = vrot.lane.b32.xlu0 %v711, 24
        %v922 = vpop.permute.xlu0 %921
        %923 = vrot.lane.b32.xlu0 %v713, 24
        %v924 = vpop.permute.xlu0 %923
        %925 = vrot.lane.b32.xlu0 %v715, 24
        %v926 = vpop.permute.xlu0 %925
        %927 = vrot.lane.b32.xlu0 %v717, 24
        %v928 = vpop.permute.xlu0 %927
        %929 = vrot.lane.b32.xlu0 %v719, 24
        %v930 = vpop.permute.xlu0 %929
        %v940 = vrot.slane %v719, 1
        %v941 = vrot.slane %v720, 1
        %v942 = vsel %vm311, %v940, %v941
        %943 = vrot.lane.b32.xlu0 %v745, 28
        %v944 = vpop.permute.xlu0 %943
        %945 = vrot.lane.b32.xlu0 %v748, 28
        %v946 = vpop.permute.xlu0 %945
        %947 = vrot.lane.b32.xlu0 %v751, 28
        %v948 = vpop.permute.xlu0 %947
        %949 = vrot.lane.b32.xlu0 %v754, 28
        %v950 = vpop.permute.xlu0 %949
        %951 = vrot.lane.b32.xlu0 %v757, 28
        %v952 = vpop.permute.xlu0 %951
        %953 = vrot.lane.b32.xlu0 %v760, 28
        %v954 = vpop.permute.xlu0 %953
        %955 = vrot.lane.b32.xlu0 %v862, 28
        %v956 = vpop.permute.xlu0 %955
        %957 = vrot.lane.b32.xlu0 %v942, 28
        %v958 = vpop.permute.xlu0 %957
        %v967 = vrot.slane %v719, 2
        %v968 = vrot.slane %v720, 2
        %v969 = vsel %vm785, %v967, %v968
        %970 = vrot.lane.b32.xlu0 %v794, 32
        %v971 = vpop.permute.xlu0 %970
        %972 = vrot.lane.b32.xlu0 %v797, 32
        %v973 = vpop.permute.xlu0 %972
        %974 = vrot.lane.b32.xlu0 %v800, 32
        %v975 = vpop.permute.xlu0 %974
        %976 = vrot.lane.b32.xlu0 %v803, 32
        %v977 = vpop.permute.xlu0 %976
        %978 = vrot.lane.b32.xlu0 %v806, 32
        %v979 = vpop.permute.xlu0 %978
        %980 = vrot.lane.b32.xlu0 %v809, 32
        %v981 = vpop.permute.xlu0 %980
        %982 = vrot.lane.b32.xlu0 %v889, 32
        %v983 = vpop.permute.xlu0 %982
        %984 = vrot.lane.b32.xlu0 %v969, 32
        %v985 = vpop.permute.xlu0 %984
        %v994 = vsel %vm670, %v701, %v762
        %v995 = vsel %vm670, %v703, %v764
        %v996 = vsel %vm670, %v705, %v766
        %v997 = vsel %vm670, %v707, %v768
        %v998 = vsel %vm670, %v709, %v770
        %v999 = vsel %vm670, %v711, %v772
        %v1000 = vsel %vm670, %v713, %v774
        %v1001 = vsel %vm670, %v715, %v776
        %v1002 = vsel %vm461, %v994, %v811
        %v1003 = vsel %vm461, %v995, %v813
        %v1004 = vsel %vm461, %v996, %v815
        %v1005 = vsel %vm461, %v997, %v817
        %v1006 = vsel %vm461, %v998, %v819
        %v1007 = vsel %vm461, %v999, %v821
        %v1008 = vsel %vm461, %v1000, %v823
        %v1009 = vsel %vm461, %v1001, %v825
        %v1010 = vsel %vm470, %v1002, %v836
        %v1011 = vsel %vm470, %v1003, %v838
        %v1012 = vsel %vm470, %v1004, %v840
        %v1013 = vsel %vm470, %v1005, %v842
        %v1014 = vsel %vm470, %v1006, %v844
        %v1015 = vsel %vm470, %v1007, %v846
        %v1016 = vsel %vm470, %v1008, %v848
        %v1017 = vsel %vm470, %v1009, %v850
        %v1018 = vsel %vm479, %v1010, %v864
        %v1019 = vsel %vm479, %v1011, %v866
        %v1020 = vsel %vm479, %v1012, %v868
        %v1021 = vsel %vm479, %v1013, %v870
        %v1022 = vsel %vm479, %v1014, %v872
        %v1023 = vsel %vm479, %v1015, %v874
        %v1024 = vsel %vm479, %v1016, %v876
        %v1025 = vsel %vm479, %v1017, %v878
        %v1026 = vsel %vm488, %v1018, %v891
        %v1027 = vsel %vm488, %v1019, %v893
        %v1028 = vsel %vm488, %v1020, %v895
        %v1029 = vsel %vm488, %v1021, %v897
        %v1030 = vsel %vm488, %v1022, %v899
        %v1031 = vsel %vm488, %v1023, %v901
        %v1032 = vsel %vm488, %v1024, %v903
        %v1033 = vsel %vm488, %v1025, %v905
        %v1034 = vsel %vm497, %v1026, %v916
        %v1035 = vsel %vm497, %v1027, %v918
        %v1036 = vsel %vm497, %v1028, %v920
        %v1037 = vsel %vm497, %v1029, %v922
        %v1038 = vsel %vm497, %v1030, %v924
        %v1039 = vsel %vm497, %v1031, %v926
        %v1040 = vsel %vm497, %v1032, %v928
        %v1041 = vsel %vm497, %v1033, %v930
        %v1042 = vsel %vm506, %v1034, %v944
        %v1043 = vsel %vm506, %v1035, %v946
        %v1044 = vsel %vm506, %v1036, %v948
        %v1045 = vsel %vm506, %v1037, %v950
        %v1046 = vsel %vm506, %v1038, %v952
        %v1047 = vsel %vm506, %v1039, %v954
        %v1048 = vsel %vm506, %v1040, %v956
        %v1049 = vsel %vm506, %v1041, %v958
        %v1050 = vsel %vm515, %v1042, %v971
        %v1051 = vsel %vm515, %v1043, %v973
        %v1052 = vsel %vm515, %v1044, %v975
        %v1053 = vsel %vm515, %v1045, %v977
        %v1054 = vsel %vm515, %v1046, %v979
        %v1055 = vsel %vm515, %v1047, %v981
        %v1056 = vsel %vm515, %v1048, %v983
        %v1057 = vsel %vm515, %v1049, %v985
        %v1058 = vld [vmem:[%s3] sm:$0xff]
        %v1059 = vld [vmem:[%s3 + $0x8] sm:$0xff]
        %v1060 = vld [vmem:[%s3 + $0x10] sm:$0xff]
        %v1061 = vld [vmem:[%s3 + $0x18] sm:$0xff]
        %v1062 = vld [vmem:[%s3 + $0x20] sm:$0xf]
        %v1063 = vld [vmem:[%s4] sm:$0x1]
        %v1065 = vlaneseq
        %v1066 = vshrl.u32 %v1065, 7
        %v1067 = vsub.s32 0, %v1066
        %v1068 = vrot.slane %v1063, %v1067
        %v1071 = vsel %vm536, %v1050, 0
        %v1074 = vsel %vm536, %v1051, 0
        %v1077 = vsel %vm536, %v1052, 0
        %v1080 = vsel %vm536, %v1053, 0
        %v1083 = vsel %vm536, %v1054, 0
        %v1086 = vsel %vm536, %v1055, 0
        %v1089 = vsel %vm536, %v1056, 0
        %v1092 = vsel %vm536, %v1057, 0
        %v1095 = vsel %vm561, %v1062, 0
        %1097 = vmatprep.subr.mxu0 0.0
        %1098 = vmatpush1.msra.mxu0 %v1058
        %1099 = vmatprep.subr.mxu0 0.0
        %1100 = vmatpush1.msra.mxu0 %v1059
        %1101 = vmatprep.subr.mxu0 0.0
        %1102 = vmatpush1.msra.mxu0 %v1060
        %1103 = vmatprep.subr.mxu0 0.0
        %1104 = vmatpush1.msra.mxu0 %v1061
        %1105 = vmatprep.subr.mxu0 0.0
        %1106 = vmatpush1.msra.mxu0 %v1095
        %1107 = vmatprep.subr.mxu0 0.0
        %1108 = vmatpush1.msra.mxu0 0.0
        %1109 = vmatprep.subr.mxu0 0.0
        %1110 = vmatpush1.msra.mxu0 0.0
        %1111 = vmatprep.subr.mxu0 0.0
        %1112 = vmatpush1.msra.mxu0 0.0
        %1113 = vmatprep.subr.mxu0 0.0
        %1114 = vmatpush1.msra.mxu0 0.0
        %1115 = vmatprep.subr.mxu0 0.0
        %1116 = vmatpush1.msra.mxu0 0.0
        %1117 = vmatprep.subr.mxu0 0.0
        %1118 = vmatpush1.msra.mxu0 0.0
        %1119 = vmatprep.subr.mxu0 0.0
        %1120 = vmatpush1.msra.mxu0 0.0
        %1121 = vmatprep.subr.mxu0 0.0
        %1122 = vmatpush1.msra.mxu0 0.0
        %1123 = vmatprep.subr.mxu0 0.0
        %1124 = vmatpush1.msra.mxu0 0.0
        %1125 = vmatprep.subr.mxu0 0.0
        %1126 = vmatpush1.msra.mxu0 0.0
        %1127 = vmatprep.subr.mxu0 0.0
        %1128 = vmatpush1.msra.mxu0 0.0
        %1129 = vmatprep.subr.mxu0 0.0
        %1130 = vmatpush1.msra.mxu0 0.0
        %1131 = vmatprep.subr.mxu0 0.0
        %1132 = vmatpush1.msra.mxu0 0.0
        %1133 = vmatprep.subr.mxu0 0.0
        %1134 = vmatpush1.msra.mxu0 0.0
        %1135 = vmatprep.subr.mxu0 0.0
        %1136 = vmatpush1.msra.mxu0 0.0
        %1137 = vmatprep.subr.mxu0 0.0
        %1138 = vmatpush1.msra.mxu0 0.0
        %1139 = vmatprep.subr.mxu0 0.0
        %1140 = vmatpush1.msra.mxu0 0.0
        %1141 = vmatprep.subr.mxu0 0.0
        %1142 = vmatpush1.msra.mxu0 0.0
        %1143 = vmatprep.subr.mxu0 0.0
        %1144 = vmatpush1.msra.mxu0 0.0
        %1145 = vmatprep.subr.mxu0 0.0
        %1146 = vmatpush1.msra.mxu0 0.0
        %1147 = vmatprep.subr.mxu0 0.0
        %1148 = vmatpush1.msra.mxu0 0.0
        %1149 = vmatprep.subr.mxu0 0.0
        %1150 = vmatpush1.msra.mxu0 0.0
        %1151 = vmatprep.subr.mxu0 0.0
        %1152 = vmatpush1.msra.mxu0 0.0
        %1153 = vmatprep.subr.mxu0 0.0
        %1154 = vmatpush1.msra.mxu0 0.0
        %1155 = vmatprep.subr.mxu0 0.0
        %1156 = vmatpush1.msra.mxu0 0.0
        %1157 = vmatprep.subr.mxu0 0.0
        %1158 = vmatpush1.msra.mxu0 0.0
        %1159 = vmatprep.subr.mxu0 0.0
        %1160 = vmatpush1.msra.mxu0 0.0
        %1161 = vmatprep.mubr.f32.mxu0 0.0
        %1162 = vmatmul.mubr.f32.gmra.mrb[0].mxu0 %v1071
        %v1163 = vpop.f32.mrb[0].mxu0
        %v1164 = vadd.f32 %v1068, %v1163
        %v1165 = vpop.f32.mrb[0].mxu0
        %1166 = vmatprep.mubr.f32.mxu0 0.0
        %1167 = vmatmul.mubr.f32.gmra.mrb[0].mxu0 %v1074
        %v1168 = vpop.f32.mrb[0].mxu0
        %v1169 = vadd.f32 %v1068, %v1168
        %v1170 = vpop.f32.mrb[0].mxu0
        %1171 = vmatprep.mubr.f32.mxu0 0.0
        %1172 = vmatmul.mubr.f32.gmra.mrb[0].mxu0 %v1077
        %v1173 = vpop.f32.mrb[0].mxu0
        %v1174 = vadd.f32 %v1068, %v1173
        %v1175 = vpop.f32.mrb[0].mxu0
        %1176 = vmatprep.mubr.f32.mxu0 0.0
        %1177 = vmatmul.mubr.f32.gmra.mrb[0].mxu0 %v1080
        %v1178 = vpop.f32.mrb[0].mxu0
        %v1179 = vadd.f32 %v1068, %v1178
        %v1180 = vpop.f32.mrb[0].mxu0
        %1181 = vmatprep.mubr.f32.mxu0 0.0
        %1182 = vmatmul.mubr.f32.gmra.mrb[0].mxu0 %v1083
        %v1183 = vpop.f32.mrb[0].mxu0
        %v1184 = vadd.f32 %v1068, %v1183
        %v1185 = vpop.f32.mrb[0].mxu0
        %1186 = vmatprep.mubr.f32.mxu0 0.0
        %1187 = vmatmul.mubr.f32.gmra.mrb[0].mxu0 %v1086
        %v1188 = vpop.f32.mrb[0].mxu0
        %v1189 = vadd.f32 %v1068, %v1188
        %v1190 = vpop.f32.mrb[0].mxu0
        %1191 = vmatprep.mubr.f32.mxu0 0.0
        %1192 = vmatmul.mubr.f32.gmra.mrb[0].mxu0 %v1089
        %v1193 = vpop.f32.mrb[0].mxu0
        %v1194 = vadd.f32 %v1068, %v1193
        %v1195 = vpop.f32.mrb[0].mxu0
        %1196 = vmatprep.mubr.f32.mxu0 0.0
        %1197 = vmatmul.mubr.f32.gmra.mrb[0].mxu0 %v1092
        %v1198 = vpop.f32.mrb[0].mxu0
        %v1199 = vadd.f32 %v1068, %v1198
        %v1200 = vpop.f32.mrb[0].mxu0
        %1201 = vdwg.mxu0
        %1202 = vst.msk [vmem:[#allocation3] sm:$0xff] %vm670, 0.0
        %1203 = vst.msk [vmem:[#allocation3 + $0x8] sm:$0x3] %vm672, 0.0
        %1204 = vst.msk [vmem:[#allocation3 + $0x10] sm:$0xff] %vm670, 0.0
        %1205 = vst.msk [vmem:[#allocation3 + $0x18] sm:$0x3] %vm672, 0.0
        %1206 = vst.msk [vmem:[#allocation3 + $0x20] sm:$0xff] %vm670, 0.0
        %1207 = vst.msk [vmem:[#allocation3 + $0x28] sm:$0x3] %vm672, 0.0
        %1208 = vst.msk [vmem:[#allocation3 + $0x30] sm:$0xff] %vm670, 0.0
        %1209 = vst.msk [vmem:[#allocation3 + $0x38] sm:$0x3] %vm672, 0.0
        %1210 = vst.msk [vmem:[#allocation3 + $0x40] sm:$0xff] %vm670, 0.0
        %1211 = vst.msk [vmem:[#allocation3 + $0x48] sm:$0x3] %vm672, 0.0
        %1212 = vst.msk [vmem:[#allocation3 + $0x50] sm:$0xff] %vm670, 0.0
        %1213 = vst.msk [vmem:[#allocation3 + $0x58] sm:$0x3] %vm672, 0.0
        %1214 = vst.msk [vmem:[#allocation3 + $0x60] sm:$0xff] %vm670, 0.0
        %1215 = vst.msk [vmem:[#allocation3 + $0x68] sm:$0x3] %vm672, 0.0
        %1216 = vst.msk [vmem:[#allocation3 + $0x70] sm:$0xff] %vm670, 0.0
        %1217 = vst.msk [vmem:[#allocation3 + $0x78] sm:$0x3] %vm672, 0.0
        %1218 = vst.msk [vmem:[#allocation3 + $0x80] sm:$0xff] %vm670, 0.0
        %1219 = vst.msk [vmem:[#allocation3 + $0x88] sm:$0x3] %vm672, 0.0
        %1220 = vst.msk [vmem:[#allocation3 + $0x90] sm:$0xff] %vm670, 0.0
        %1221 = vst.msk [vmem:[#allocation3 + $0x98] sm:$0x3] %vm672, 0.0
        %s1222 = scalar_lea.vmem [#allocation3], 16
        %1223 = vst.msk [vmem:[%s1222 + $0x1] sm:$0xff] %vm670, %v1164
        %1224 = vst.msk [vmem:[%s1222 + $0x11] sm:$0xff] %vm670, %v1169
        %1225 = vst.msk [vmem:[%s1222 + $0x21] sm:$0xff] %vm670, %v1174
        %1226 = vst.msk [vmem:[%s1222 + $0x31] sm:$0xff] %vm670, %v1179
        %1227 = vst.msk [vmem:[%s1222 + $0x41] sm:$0xff] %vm670, %v1184
        %1228 = vst.msk [vmem:[%s1222 + $0x51] sm:$0xff] %vm670, %v1189
        %1229 = vst.msk [vmem:[%s1222 + $0x61] sm:$0xff] %vm670, %v1194
        %1230 = vst.msk [vmem:[%s1222 + $0x71] sm:$0xff] %vm670, %v1199
        %v1231 = vld [vmem:[#allocation3] sm:$0xff]
        %v1232 = vld [vmem:[#allocation3 + $0x8] sm:$0x3]
        %v1233 = vld [vmem:[#allocation3 + $0x10] sm:$0xff]
        %v1234 = vld [vmem:[#allocation3 + $0x18] sm:$0x3]
        %v1235 = vld [vmem:[#allocation3 + $0x20] sm:$0xff]
        %v1236 = vld [vmem:[#allocation3 + $0x28] sm:$0x3]
        %v1237 = vld [vmem:[#allocation3 + $0x30] sm:$0xff]
        %v1238 = vld [vmem:[#allocation3 + $0x38] sm:$0x3]
        %v1239 = vld [vmem:[#allocation3 + $0x40] sm:$0xff]
        %v1240 = vld [vmem:[#allocation3 + $0x48] sm:$0x3]
        %v1241 = vld [vmem:[#allocation3 + $0x50] sm:$0xff]
        %v1242 = vld [vmem:[#allocation3 + $0x58] sm:$0x3]
        %v1243 = vld [vmem:[#allocation3 + $0x60] sm:$0xff]
        %v1244 = vld [vmem:[#allocation3 + $0x68] sm:$0x3]
        %v1245 = vld [vmem:[#allocation3 + $0x70] sm:$0xff]
        %v1246 = vld [vmem:[#allocation3 + $0x78] sm:$0x3]
        %v1247 = vld [vmem:[#allocation3 + $0x80] sm:$0xff]
        %v1248 = vld [vmem:[#allocation3 + $0x88] sm:$0x3]
        %v1249 = vld [vmem:[#allocation3 + $0x90] sm:$0xff]
        %v1250 = vld [vmem:[#allocation3 + $0x98] sm:$0x3]
        %v1267 = vrot.slane %v1231, 1
        %v1268 = vrot.slane %v1232, 1
        %v1269 = vsel %vm311, %v1267, %v1268
        %v1270 = vrot.slane %v1233, 1
        %v1271 = vrot.slane %v1234, 1
        %v1272 = vsel %vm311, %v1270, %v1271
        %v1273 = vrot.slane %v1235, 1
        %v1274 = vrot.slane %v1236, 1
        %v1275 = vsel %vm311, %v1273, %v1274
        %v1276 = vrot.slane %v1237, 1
        %v1277 = vrot.slane %v1238, 1
        %v1278 = vsel %vm311, %v1276, %v1277
        %v1279 = vrot.slane %v1239, 1
        %v1280 = vrot.slane %v1240, 1
        %v1281 = vsel %vm311, %v1279, %v1280
        %v1282 = vrot.slane %v1241, 1
        %v1283 = vrot.slane %v1242, 1
        %v1284 = vsel %vm311, %v1282, %v1283
        %v1285 = vrot.slane %v1243, 1
        %v1286 = vrot.slane %v1244, 1
        %v1287 = vsel %vm311, %v1285, %v1286
        %v1288 = vrot.slane %v1245, 1
        %v1289 = vrot.slane %v1246, 1
        %v1290 = vsel %vm311, %v1288, %v1289
        %1291 = vrot.lane.b32.xlu0 %v1269, 4
        %v1292 = vpop.permute.xlu0 %1291
        %1293 = vrot.lane.b32.xlu0 %v1272, 4
        %v1294 = vpop.permute.xlu0 %1293
        %1295 = vrot.lane.b32.xlu0 %v1275, 4
        %v1296 = vpop.permute.xlu0 %1295
        %1297 = vrot.lane.b32.xlu0 %v1278, 4
        %v1298 = vpop.permute.xlu0 %1297
        %1299 = vrot.lane.b32.xlu0 %v1281, 4
        %v1300 = vpop.permute.xlu0 %1299
        %1301 = vrot.lane.b32.xlu0 %v1284, 4
        %v1302 = vpop.permute.xlu0 %1301
        %1303 = vrot.lane.b32.xlu0 %v1287, 4
        %v1304 = vpop.permute.xlu0 %1303
        %1305 = vrot.lane.b32.xlu0 %v1290, 4
        %v1306 = vpop.permute.xlu0 %1305
        %v1315 = vrot.slane %v1231, 2
        %v1316 = vrot.slane %v1232, 2
        %v1317 = vsel %vm785, %v1315, %v1316
        %v1318 = vrot.slane %v1233, 2
        %v1319 = vrot.slane %v1234, 2
        %v1320 = vsel %vm785, %v1318, %v1319
        %v1321 = vrot.slane %v1235, 2
        %v1322 = vrot.slane %v1236, 2
        %v1323 = vsel %vm785, %v1321, %v1322
        %v1324 = vrot.slane %v1237, 2
        %v1325 = vrot.slane %v1238, 2
        %v1326 = vsel %vm785, %v1324, %v1325
        %v1327 = vrot.slane %v1239, 2
        %v1328 = vrot.slane %v1240, 2
        %v1329 = vsel %vm785, %v1327, %v1328
        %v1330 = vrot.slane %v1241, 2
        %v1331 = vrot.slane %v1242, 2
        %v1332 = vsel %vm785, %v1330, %v1331
        %v1333 = vrot.slane %v1243, 2
        %v1334 = vrot.slane %v1244, 2
        %v1335 = vsel %vm785, %v1333, %v1334
        %v1336 = vrot.slane %v1245, 2
        %v1337 = vrot.slane %v1246, 2
        %v1338 = vsel %vm785, %v1336, %v1337
        %1339 = vrot.lane.b32.xlu0 %v1317, 8
        %v1340 = vpop.permute.xlu0 %1339
        %1341 = vrot.lane.b32.xlu0 %v1320, 8
        %v1342 = vpop.permute.xlu0 %1341
        %1343 = vrot.lane.b32.xlu0 %v1323, 8
        %v1344 = vpop.permute.xlu0 %1343
        %1345 = vrot.lane.b32.xlu0 %v1326, 8
        %v1346 = vpop.permute.xlu0 %1345
        %1347 = vrot.lane.b32.xlu0 %v1329, 8
        %v1348 = vpop.permute.xlu0 %1347
        %1349 = vrot.lane.b32.xlu0 %v1332, 8
        %v1350 = vpop.permute.xlu0 %1349
        %1351 = vrot.lane.b32.xlu0 %v1335, 8
        %v1352 = vpop.permute.xlu0 %1351
        %1353 = vrot.lane.b32.xlu0 %v1338, 8
        %v1354 = vpop.permute.xlu0 %1353
        %1364 = vrot.lane.b32.xlu0 %v1233, 12
        %v1365 = vpop.permute.xlu0 %1364
        %1366 = vrot.lane.b32.xlu0 %v1235, 12
        %v1367 = vpop.permute.xlu0 %1366
        %1368 = vrot.lane.b32.xlu0 %v1237, 12
        %v1369 = vpop.permute.xlu0 %1368
        %1370 = vrot.lane.b32.xlu0 %v1239, 12
        %v1371 = vpop.permute.xlu0 %1370
        %1372 = vrot.lane.b32.xlu0 %v1241, 12
        %v1373 = vpop.permute.xlu0 %1372
        %1374 = vrot.lane.b32.xlu0 %v1243, 12
        %v1375 = vpop.permute.xlu0 %1374
        %1376 = vrot.lane.b32.xlu0 %v1245, 12
        %v1377 = vpop.permute.xlu0 %1376
        %1378 = vrot.lane.b32.xlu0 %v1247, 12
        %v1379 = vpop.permute.xlu0 %1378
        %v1389 = vrot.slane %v1247, 1
        %v1390 = vrot.slane %v1248, 1
        %v1391 = vsel %vm311, %v1389, %v1390
        %1392 = vrot.lane.b32.xlu0 %v1272, 16
        %v1393 = vpop.permute.xlu0 %1392
        %1394 = vrot.lane.b32.xlu0 %v1275, 16
        %v1395 = vpop.permute.xlu0 %1394
        %1396 = vrot.lane.b32.xlu0 %v1278, 16
        %v1397 = vpop.permute.xlu0 %1396
        %1398 = vrot.lane.b32.xlu0 %v1281, 16
        %v1399 = vpop.permute.xlu0 %1398
        %1400 = vrot.lane.b32.xlu0 %v1284, 16
        %v1401 = vpop.permute.xlu0 %1400
        %1402 = vrot.lane.b32.xlu0 %v1287, 16
        %v1403 = vpop.permute.xlu0 %1402
        %1404 = vrot.lane.b32.xlu0 %v1290, 16
        %v1405 = vpop.permute.xlu0 %1404
        %1406 = vrot.lane.b32.xlu0 %v1391, 16
        %v1407 = vpop.permute.xlu0 %1406
        %v1416 = vrot.slane %v1247, 2
        %v1417 = vrot.slane %v1248, 2
        %v1418 = vsel %vm785, %v1416, %v1417
        %1419 = vrot.lane.b32.xlu0 %v1320, 20
        %v1420 = vpop.permute.xlu0 %1419
        %1421 = vrot.lane.b32.xlu0 %v1323, 20
        %v1422 = vpop.permute.xlu0 %1421
        %1423 = vrot.lane.b32.xlu0 %v1326, 20
        %v1424 = vpop.permute.xlu0 %1423
        %1425 = vrot.lane.b32.xlu0 %v1329, 20
        %v1426 = vpop.permute.xlu0 %1425
        %1427 = vrot.lane.b32.xlu0 %v1332, 20
        %v1428 = vpop.permute.xlu0 %1427
        %1429 = vrot.lane.b32.xlu0 %v1335, 20
        %v1430 = vpop.permute.xlu0 %1429
        %1431 = vrot.lane.b32.xlu0 %v1338, 20
        %v1432 = vpop.permute.xlu0 %1431
        %1433 = vrot.lane.b32.xlu0 %v1418, 20
        %v1434 = vpop.permute.xlu0 %1433
        %1444 = vrot.lane.b32.xlu0 %v1235, 24
        %v1445 = vpop.permute.xlu0 %1444
        %1446 = vrot.lane.b32.xlu0 %v1237, 24
        %v1447 = vpop.permute.xlu0 %1446
        %1448 = vrot.lane.b32.xlu0 %v1239, 24
        %v1449 = vpop.permute.xlu0 %1448
        %1450 = vrot.lane.b32.xlu0 %v1241, 24
        %v1451 = vpop.permute.xlu0 %1450
        %1452 = vrot.lane.b32.xlu0 %v1243, 24
        %v1453 = vpop.permute.xlu0 %1452
        %1454 = vrot.lane.b32.xlu0 %v1245, 24
        %v1455 = vpop.permute.xlu0 %1454
        %1456 = vrot.lane.b32.xlu0 %v1247, 24
        %v1457 = vpop.permute.xlu0 %1456
        %1458 = vrot.lane.b32.xlu0 %v1249, 24
        %v1459 = vpop.permute.xlu0 %1458
        %v1469 = vrot.slane %v1249, 1
        %v1470 = vrot.slane %v1250, 1
        %v1471 = vsel %vm311, %v1469, %v1470
        %1472 = vrot.lane.b32.xlu0 %v1275, 28
        %v1473 = vpop.permute.xlu0 %1472
        %1474 = vrot.lane.b32.xlu0 %v1278, 28
        %v1475 = vpop.permute.xlu0 %1474
        %1476 = vrot.lane.b32.xlu0 %v1281, 28
        %v1477 = vpop.permute.xlu0 %1476
        %1478 = vrot.lane.b32.xlu0 %v1284, 28
        %v1479 = vpop.permute.xlu0 %1478
        %1480 = vrot.lane.b32.xlu0 %v1287, 28
        %v1481 = vpop.permute.xlu0 %1480
        %1482 = vrot.lane.b32.xlu0 %v1290, 28
        %v1483 = vpop.permute.xlu0 %1482
        %1484 = vrot.lane.b32.xlu0 %v1391, 28
        %v1485 = vpop.permute.xlu0 %1484
        %1486 = vrot.lane.b32.xlu0 %v1471, 28
        %v1487 = vpop.permute.xlu0 %1486
        %v1496 = vrot.slane %v1249, 2
        %v1497 = vrot.slane %v1250, 2
        %v1498 = vsel %vm785, %v1496, %v1497
        %1499 = vrot.lane.b32.xlu0 %v1323, 32
        %v1500 = vpop.permute.xlu0 %1499
        %1501 = vrot.lane.b32.xlu0 %v1326, 32
        %v1502 = vpop.permute.xlu0 %1501
        %1503 = vrot.lane.b32.xlu0 %v1329, 32
        %v1504 = vpop.permute.xlu0 %1503
        %1505 = vrot.lane.b32.xlu0 %v1332, 32
        %v1506 = vpop.permute.xlu0 %1505
        %1507 = vrot.lane.b32.xlu0 %v1335, 32
        %v1508 = vpop.permute.xlu0 %1507
        %1509 = vrot.lane.b32.xlu0 %v1338, 32
        %v1510 = vpop.permute.xlu0 %1509
        %1511 = vrot.lane.b32.xlu0 %v1418, 32
        %v1512 = vpop.permute.xlu0 %1511
        %1513 = vrot.lane.b32.xlu0 %v1498, 32
        %v1514 = vpop.permute.xlu0 %1513
        %v1523 = vsel %vm670, %v1231, %v1292
        %v1524 = vsel %vm670, %v1233, %v1294
        %v1525 = vsel %vm670, %v1235, %v1296
        %v1526 = vsel %vm670, %v1237, %v1298
        %v1527 = vsel %vm670, %v1239, %v1300
        %v1528 = vsel %vm670, %v1241, %v1302
        %v1529 = vsel %vm670, %v1243, %v1304
        %v1530 = vsel %vm670, %v1245, %v1306
        %v1531 = vsel %vm461, %v1523, %v1340
        %v1532 = vsel %vm461, %v1524, %v1342
        %v1533 = vsel %vm461, %v1525, %v1344
        %v1534 = vsel %vm461, %v1526, %v1346
        %v1535 = vsel %vm461, %v1527, %v1348
        %v1536 = vsel %vm461, %v1528, %v1350
        %v1537 = vsel %vm461, %v1529, %v1352
        %v1538 = vsel %vm461, %v1530, %v1354
        %v1539 = vsel %vm470, %v1531, %v1365
        %v1540 = vsel %vm470, %v1532, %v1367
        %v1541 = vsel %vm470, %v1533, %v1369
        %v1542 = vsel %vm470, %v1534, %v1371
        %v1543 = vsel %vm470, %v1535, %v1373
        %v1544 = vsel %vm470, %v1536, %v1375
        %v1545 = vsel %vm470, %v1537, %v1377
        %v1546 = vsel %vm470, %v1538, %v1379
        %v1547 = vsel %vm479, %v1539, %v1393
        %v1548 = vsel %vm479, %v1540, %v1395
        %v1549 = vsel %vm479, %v1541, %v1397
        %v1550 = vsel %vm479, %v1542, %v1399
        %v1551 = vsel %vm479, %v1543, %v1401
        %v1552 = vsel %vm479, %v1544, %v1403
        %v1553 = vsel %vm479, %v1545, %v1405
        %v1554 = vsel %vm479, %v1546, %v1407
        %v1555 = vsel %vm488, %v1547, %v1420
        %v1556 = vsel %vm488, %v1548, %v1422
        %v1557 = vsel %vm488, %v1549, %v1424
        %v1558 = vsel %vm488, %v1550, %v1426
        %v1559 = vsel %vm488, %v1551, %v1428
        %v1560 = vsel %vm488, %v1552, %v1430
        %v1561 = vsel %vm488, %v1553, %v1432
        %v1562 = vsel %vm488, %v1554, %v1434
        %v1563 = vsel %vm497, %v1555, %v1445
        %v1564 = vsel %vm497, %v1556, %v1447
        %v1565 = vsel %vm497, %v1557, %v1449
        %v1566 = vsel %vm497, %v1558, %v1451
        %v1567 = vsel %vm497, %v1559, %v1453
        %v1568 = vsel %vm497, %v1560, %v1455
        %v1569 = vsel %vm497, %v1561, %v1457
        %v1570 = vsel %vm497, %v1562, %v1459
        %v1571 = vsel %vm506, %v1563, %v1473
        %v1572 = vsel %vm506, %v1564, %v1475
        %v1573 = vsel %vm506, %v1565, %v1477
        %v1574 = vsel %vm506, %v1566, %v1479
        %v1575 = vsel %vm506, %v1567, %v1481
        %v1576 = vsel %vm506, %v1568, %v1483
        %v1577 = vsel %vm506, %v1569, %v1485
        %v1578 = vsel %vm506, %v1570, %v1487
        %v1579 = vsel %vm515, %v1571, %v1500
        %v1580 = vsel %vm515, %v1572, %v1502
        %v1581 = vsel %vm515, %v1573, %v1504
        %v1582 = vsel %vm515, %v1574, %v1506
        %v1583 = vsel %vm515, %v1575, %v1508
        %v1584 = vsel %vm515, %v1576, %v1510
        %v1585 = vsel %vm515, %v1577, %v1512
        %v1586 = vsel %vm515, %v1578, %v1514
        %v1587 = vld [vmem:[%s5] sm:$0xff]
        %v1588 = vld [vmem:[%s5 + $0x8] sm:$0xff]
        %v1589 = vld [vmem:[%s5 + $0x10] sm:$0xff]
        %v1590 = vld [vmem:[%s5 + $0x18] sm:$0xff]
        %v1591 = vld [vmem:[%s5 + $0x20] sm:$0xf]
        %v1592 = vld [vmem:[%s6] sm:$0x1]
        %v1594 = vlaneseq
        %v1595 = vshrl.u32 %v1594, 7
        %v1596 = vsub.s32 0, %v1595
        %v1597 = vrot.slane %v1592, %v1596
        %v1600 = vsel %vm536, %v1579, 0
        %v1603 = vsel %vm536, %v1580, 0
        %v1606 = vsel %vm536, %v1581, 0
        %v1609 = vsel %vm536, %v1582, 0
        %v1612 = vsel %vm536, %v1583, 0
        %v1615 = vsel %vm536, %v1584, 0
        %v1618 = vsel %vm536, %v1585, 0
        %v1621 = vsel %vm536, %v1586, 0
        %v1624 = vsel %vm561, %v1591, 0
        %1626 = vmatprep.subr.mxu0 0.0
        %1627 = vmatpush1.msra.mxu0 %v1587
        %1628 = vmatprep.subr.mxu0 0.0
        %1629 = vmatpush1.msra.mxu0 %v1588
        %1630 = vmatprep.subr.mxu0 0.0
        %1631 = vmatpush1.msra.mxu0 %v1589
        %1632 = vmatprep.subr.mxu0 0.0
        %1633 = vmatpush1.msra.mxu0 %v1590
        %1634 = vmatprep.subr.mxu0 0.0
        %1635 = vmatpush1.msra.mxu0 %v1624
        %1636 = vmatprep.subr.mxu0 0.0
        %1637 = vmatpush1.msra.mxu0 0.0
        %1638 = vmatprep.subr.mxu0 0.0
        %1639 = vmatpush1.msra.mxu0 0.0
        %1640 = vmatprep.subr.mxu0 0.0
        %1641 = vmatpush1.msra.mxu0 0.0
        %1642 = vmatprep.subr.mxu0 0.0
        %1643 = vmatpush1.msra.mxu0 0.0
        %1644 = vmatprep.subr.mxu0 0.0
        %1645 = vmatpush1.msra.mxu0 0.0
        %1646 = vmatprep.subr.mxu0 0.0
        %1647 = vmatpush1.msra.mxu0 0.0
        %1648 = vmatprep.subr.mxu0 0.0
        %1649 = vmatpush1.msra.mxu0 0.0
        %1650 = vmatprep.subr.mxu0 0.0
        %1651 = vmatpush1.msra.mxu0 0.0
        %1652 = vmatprep.subr.mxu0 0.0
        %1653 = vmatpush1.msra.mxu0 0.0
        %1654 = vmatprep.subr.mxu0 0.0
        %1655 = vmatpush1.msra.mxu0 0.0
        %1656 = vmatprep.subr.mxu0 0.0
        %1657 = vmatpush1.msra.mxu0 0.0
        %1658 = vmatprep.subr.mxu0 0.0
        %1659 = vmatpush1.msra.mxu0 0.0
        %1660 = vmatprep.subr.mxu0 0.0
        %1661 = vmatpush1.msra.mxu0 0.0
        %1662 = vmatprep.subr.mxu0 0.0
        %1663 = vmatpush1.msra.mxu0 0.0
        %1664 = vmatprep.subr.mxu0 0.0
        %1665 = vmatpush1.msra.mxu0 0.0
        %1666 = vmatprep.subr.mxu0 0.0
        %1667 = vmatpush1.msra.mxu0 0.0
        %1668 = vmatprep.subr.mxu0 0.0
        %1669 = vmatpush1.msra.mxu0 0.0
        %1670 = vmatprep.subr.mxu0 0.0
        %1671 = vmatpush1.msra.mxu0 0.0
        %1672 = vmatprep.subr.mxu0 0.0
        %1673 = vmatpush1.msra.mxu0 0.0
        %1674 = vmatprep.subr.mxu0 0.0
        %1675 = vmatpush1.msra.mxu0 0.0
        %1676 = vmatprep.subr.mxu0 0.0
        %1677 = vmatpush1.msra.mxu0 0.0
        %1678 = vmatprep.subr.mxu0 0.0
        %1679 = vmatpush1.msra.mxu0 0.0
        %1680 = vmatprep.subr.mxu0 0.0
        %1681 = vmatpush1.msra.mxu0 0.0
        %1682 = vmatprep.subr.mxu0 0.0
        %1683 = vmatpush1.msra.mxu0 0.0
        %1684 = vmatprep.subr.mxu0 0.0
        %1685 = vmatpush1.msra.mxu0 0.0
        %1686 = vmatprep.subr.mxu0 0.0
        %1687 = vmatpush1.msra.mxu0 0.0
        %1688 = vmatprep.subr.mxu0 0.0
        %1689 = vmatpush1.msra.mxu0 0.0
        %1690 = vmatprep.mubr.f32.mxu0 0.0
        %1691 = vmatmul.mubr.f32.gmra.mrb[0].mxu0 %v1600
        %v1692 = vpop.f32.mrb[0].mxu0
        %v1693 = vadd.f32 %v1597, %v1692
        %v1694 = vpop.f32.mrb[0].mxu0
        %1695 = vmatprep.mubr.f32.mxu0 0.0
        %1696 = vmatmul.mubr.f32.gmra.mrb[0].mxu0 %v1603
        %v1697 = vpop.f32.mrb[0].mxu0
        %v1698 = vadd.f32 %v1597, %v1697
        %v1699 = vpop.f32.mrb[0].mxu0
        %1700 = vmatprep.mubr.f32.mxu0 0.0
        %1701 = vmatmul.mubr.f32.gmra.mrb[0].mxu0 %v1606
        %v1702 = vpop.f32.mrb[0].mxu0
        %v1703 = vadd.f32 %v1597, %v1702
        %v1704 = vpop.f32.mrb[0].mxu0
        %1705 = vmatprep.mubr.f32.mxu0 0.0
        %1706 = vmatmul.mubr.f32.gmra.mrb[0].mxu0 %v1609
        %v1707 = vpop.f32.mrb[0].mxu0
        %v1708 = vadd.f32 %v1597, %v1707
        %v1709 = vpop.f32.mrb[0].mxu0
        %1710 = vmatprep.mubr.f32.mxu0 0.0
        %1711 = vmatmul.mubr.f32.gmra.mrb[0].mxu0 %v1612
        %v1712 = vpop.f32.mrb[0].mxu0
        %v1713 = vadd.f32 %v1597, %v1712
        %v1714 = vpop.f32.mrb[0].mxu0
        %1715 = vmatprep.mubr.f32.mxu0 0.0
        %1716 = vmatmul.mubr.f32.gmra.mrb[0].mxu0 %v1615
        %v1717 = vpop.f32.mrb[0].mxu0
        %v1718 = vadd.f32 %v1597, %v1717
        %v1719 = vpop.f32.mrb[0].mxu0
        %1720 = vmatprep.mubr.f32.mxu0 0.0
        %1721 = vmatmul.mubr.f32.gmra.mrb[0].mxu0 %v1618
        %v1722 = vpop.f32.mrb[0].mxu0
        %v1723 = vadd.f32 %v1597, %v1722
        %v1724 = vpop.f32.mrb[0].mxu0
        %1725 = vmatprep.mubr.f32.mxu0 0.0
        %1726 = vmatmul.mubr.f32.gmra.mrb[0].mxu0 %v1621
        %v1727 = vpop.f32.mrb[0].mxu0
        %v1728 = vadd.f32 %v1597, %v1727
        %v1729 = vpop.f32.mrb[0].mxu0
        %1730 = vdwg.mxu0
        %1731 = vst.msk [vmem:[#allocation4] sm:$0xff] %vm461, -inf
        %vm1732 = vcmask 58368
        %1733 = vst.msk [vmem:[#allocation4 + $0x8] sm:$0x3] %vm1732, -inf
        %1734 = vst.msk [vmem:[#allocation4 + $0x10] sm:$0xff] %vm461, -inf
        %1735 = vst.msk [vmem:[#allocation4 + $0x18] sm:$0x3] %vm1732, -inf
        %1736 = vst.msk [vmem:[#allocation4 + $0x20] sm:$0xff] %vm461, -inf
        %1737 = vst.msk [vmem:[#allocation4 + $0x28] sm:$0x3] %vm1732, -inf
        %1738 = vst.msk [vmem:[#allocation4 + $0x30] sm:$0xff] %vm461, -inf
        %1739 = vst.msk [vmem:[#allocation4 + $0x38] sm:$0x3] %vm1732, -inf
        %1740 = vst.msk [vmem:[#allocation4 + $0x40] sm:$0xff] %vm461, -inf
        %1741 = vst.msk [vmem:[#allocation4 + $0x48] sm:$0x3] %vm1732, -inf
        %1742 = vst.msk [vmem:[#allocation4 + $0x50] sm:$0xff] %vm461, -inf
        %1743 = vst.msk [vmem:[#allocation4 + $0x58] sm:$0x3] %vm1732, -inf
        %1744 = vst.msk [vmem:[#allocation4 + $0x60] sm:$0xff] %vm461, -inf
        %1745 = vst.msk [vmem:[#allocation4 + $0x68] sm:$0x3] %vm1732, -inf
        %1746 = vst.msk [vmem:[#allocation4 + $0x70] sm:$0xff] %vm461, -inf
        %1747 = vst.msk [vmem:[#allocation4 + $0x78] sm:$0x3] %vm1732, -inf
        %1748 = vst.msk [vmem:[#allocation4 + $0x80] sm:$0xff] %vm461, -inf
        %1749 = vst.msk [vmem:[#allocation4 + $0x88] sm:$0x3] %vm1732, -inf
        %1750 = vst.msk [vmem:[#allocation4 + $0x90] sm:$0xff] %vm461, -inf
        %1751 = vst.msk [vmem:[#allocation4 + $0x98] sm:$0x3] %vm1732, -inf
        %s1752 = scalar_lea.vmem [#allocation4], 16
        %1753 = vst.msk [vmem:[%s1752 + $0x1] sm:$0xff] %vm461, %v1693
        %1754 = vst.msk [vmem:[%s1752 + $0x11] sm:$0xff] %vm461, %v1698
        %1755 = vst.msk [vmem:[%s1752 + $0x21] sm:$0xff] %vm461, %v1703
        %1756 = vst.msk [vmem:[%s1752 + $0x31] sm:$0xff] %vm461, %v1708
        %1757 = vst.msk [vmem:[%s1752 + $0x41] sm:$0xff] %vm461, %v1713
        %1758 = vst.msk [vmem:[%s1752 + $0x51] sm:$0xff] %vm461, %v1718
        %1759 = vst.msk [vmem:[%s1752 + $0x61] sm:$0xff] %vm461, %v1723
        %1760 = vst.msk [vmem:[%s1752 + $0x71] sm:$0xff] %vm461, %v1728
        %v1761 = vld [vmem:[#allocation4] sm:$0xff]
        %v1762 = vld [vmem:[#allocation4 + $0x8] sm:$0x3]
        %v1763 = vld [vmem:[#allocation4 + $0x10] sm:$0xff]
        %v1764 = vld [vmem:[#allocation4 + $0x18] sm:$0x3]
        %v1765 = vld [vmem:[#allocation4 + $0x20] sm:$0xff]
        %v1766 = vld [vmem:[#allocation4 + $0x28] sm:$0x3]
        %v1767 = vld [vmem:[#allocation4 + $0x30] sm:$0xff]
        %v1768 = vld [vmem:[#allocation4 + $0x38] sm:$0x3]
        %v1769 = vld [vmem:[#allocation4 + $0x40] sm:$0xff]
        %v1770 = vld [vmem:[#allocation4 + $0x48] sm:$0x3]
        %v1771 = vld [vmem:[#allocation4 + $0x50] sm:$0xff]
        %v1772 = vld [vmem:[#allocation4 + $0x58] sm:$0x3]
        %v1773 = vld [vmem:[#allocation4 + $0x60] sm:$0xff]
        %v1774 = vld [vmem:[#allocation4 + $0x68] sm:$0x3]
        %v1775 = vld [vmem:[#allocation4 + $0x70] sm:$0xff]
        %v1776 = vld [vmem:[#allocation4 + $0x78] sm:$0x3]
        %v1777 = vld [vmem:[#allocation4 + $0x80] sm:$0xff]
        %v1778 = vld [vmem:[#allocation4 + $0x88] sm:$0x3]
        %v1787 = vrot.slane %v1761, 1
        %v1788 = vrot.slane %v1762, 1
        %v1789 = vsel %vm311, %v1787, %v1788
        %v1790 = vrot.slane %v1765, 1
        %v1791 = vrot.slane %v1766, 1
        %v1792 = vsel %vm311, %v1790, %v1791
        %v1793 = vrot.slane %v1769, 1
        %v1794 = vrot.slane %v1770, 1
        %v1795 = vsel %vm311, %v1793, %v1794
        %v1796 = vrot.slane %v1773, 1
        %v1797 = vrot.slane %v1774, 1
        %v1798 = vsel %vm311, %v1796, %v1797
        %v1803 = vmax.f32 %v1761, %v1789
        %v1804 = vmax.f32 %v1765, %v1792
        %v1805 = vmax.f32 %v1769, %v1795
        %v1806 = vmax.f32 %v1773, %v1798
        %v1807 = vrot.slane %v1761, 2
        %v1808 = vrot.slane %v1762, 2
        %v1809 = vsel %vm785, %v1807, %v1808
        %v1810 = vrot.slane %v1765, 2
        %v1811 = vrot.slane %v1766, 2
        %v1812 = vsel %vm785, %v1810, %v1811
        %v1813 = vrot.slane %v1769, 2
        %v1814 = vrot.slane %v1770, 2
        %v1815 = vsel %vm785, %v1813, %v1814
        %v1816 = vrot.slane %v1773, 2
        %v1817 = vrot.slane %v1774, 2
        %v1818 = vsel %vm785, %v1816, %v1817
        %v1823 = vmax.f32 %v1803, %v1809
        %v1824 = vmax.f32 %v1804, %v1812
        %v1825 = vmax.f32 %v1805, %v1815
        %v1826 = vmax.f32 %v1806, %v1818
        %v1827 = vmax.f32 %v1823, %v1763
        %v1828 = vmax.f32 %v1824, %v1767
        %v1829 = vmax.f32 %v1825, %v1771
        %v1830 = vmax.f32 %v1826, %v1775
        %v1839 = vrot.slane %v1763, 1
        %v1840 = vrot.slane %v1764, 1
        %v1841 = vsel %vm311, %v1839, %v1840
        %v1842 = vrot.slane %v1767, 1
        %v1843 = vrot.slane %v1768, 1
        %v1844 = vsel %vm311, %v1842, %v1843
        %v1845 = vrot.slane %v1771, 1
        %v1846 = vrot.slane %v1772, 1
        %v1847 = vsel %vm311, %v1845, %v1846
        %v1848 = vrot.slane %v1775, 1
        %v1849 = vrot.slane %v1776, 1
        %v1850 = vsel %vm311, %v1848, %v1849
        %v1855 = vmax.f32 %v1827, %v1841
        %v1856 = vmax.f32 %v1828, %v1844
        %v1857 = vmax.f32 %v1829, %v1847
        %v1858 = vmax.f32 %v1830, %v1850
        %v1859 = vrot.slane %v1763, 2
        %v1860 = vrot.slane %v1764, 2
        %v1861 = vsel %vm785, %v1859, %v1860
        %v1862 = vrot.slane %v1767, 2
        %v1863 = vrot.slane %v1768, 2
        %v1864 = vsel %vm785, %v1862, %v1863
        %v1865 = vrot.slane %v1771, 2
        %v1866 = vrot.slane %v1772, 2
        %v1867 = vsel %vm785, %v1865, %v1866
        %v1868 = vrot.slane %v1775, 2
        %v1869 = vrot.slane %v1776, 2
        %v1870 = vsel %vm785, %v1868, %v1869
        %v1875 = vmax.f32 %v1855, %v1861
        %v1876 = vmax.f32 %v1856, %v1864
        %v1877 = vmax.f32 %v1857, %v1867
        %v1878 = vmax.f32 %v1858, %v1870
        %v1879 = vmax.f32 %v1875, %v1765
        %v1880 = vmax.f32 %v1876, %v1769
        %v1881 = vmax.f32 %v1877, %v1773
        %v1882 = vmax.f32 %v1878, %v1777
        %v1885 = vrot.slane %v1777, 1
        %v1886 = vrot.slane %v1778, 1
        %v1887 = vsel %vm311, %v1885, %v1886
        %v1889 = vmax.f32 %v1879, %v1792
        %v1890 = vmax.f32 %v1880, %v1795
        %v1891 = vmax.f32 %v1881, %v1798
        %v1892 = vmax.f32 %v1882, %v1887
        %v1893 = vrot.slane %v1777, 2
        %v1894 = vrot.slane %v1778, 2
        %v1895 = vsel %vm785, %v1893, %v1894
        %v1897 = vmax.f32 %v1889, %v1812
        %v1898 = vmax.f32 %v1890, %v1815
        %v1899 = vmax.f32 %v1891, %v1818
        %v1900 = vmax.f32 %v1892, %v1895
        %v1905 = vrot.slane %v1897, 1
        %v1906 = vrot.slane %v1898, 1
        %v1907 = vrot.slane %v1899, 1
        %v1908 = vrot.slane %v1900, 1
        %v1913 = vrot.slane %v1897, 2
        %v1914 = vrot.slane %v1898, 2
        %v1915 = vrot.slane %v1899, 2
        %v1916 = vrot.slane %v1900, 2
        %v1921 = vrot.slane %v1897, 3
        %v1922 = vrot.slane %v1898, 3
        %v1923 = vrot.slane %v1899, 3
        %v1924 = vrot.slane %v1900, 3
        %vm1929 = vcmask 1040384
        %v1930 = vsel %vm1929, %v1897, %v1905
        %v1931 = vsel %vm1929, %v1898, %v1906
        %v1932 = vsel %vm1929, %v1899, %v1907
        %v1933 = vsel %vm1929, %v1900, %v1908
        %vm1934 = vcmask 1041408
        %v1935 = vsel %vm1934, %v1930, %v1913
        %v1936 = vsel %vm1934, %v1931, %v1914
        %v1937 = vsel %vm1934, %v1932, %v1915
        %v1938 = vsel %vm1934, %v1933, %v1916
        %vm1939 = vcmask 1042432
        %v1940 = vsel %vm1939, %v1935, %v1921
        %v1941 = vsel %vm1939, %v1936, %v1922
        %v1942 = vsel %vm1939, %v1937, %v1923
        %v1943 = vsel %vm1939, %v1938, %v1924
        %vm1944 = vcmask 60416
        %1945 = vst.msk [vmem:[%s271] sm:$0xf] %vm1944, %v1940
        %1946 = vst.msk [vmem:[%s271 + $0x4] sm:$0xf] %vm1944, %v1941
        %1947 = vst.msk [vmem:[%s271 + $0x8] sm:$0xf] %vm1944, %v1942
        %1948 = vst.msk [vmem:[%s271 + $0xc] sm:$0xf] %vm1944, %v1943
        %s1949 = sand.u32 %s181, 1
        %s1950 = scalar_lea.sflag [#allocation6], %s1949
        %s1951 = sand.u32 %s181, 1
        %s1952 = smul.addr %s1951, 16
        %s1953 = scalar_lea.vmem [#allocation5], %s1952
        // Predicated region
        $region49: #{tpu_custom_call.1} parent=47 // pred_check
          %p1954 = pneg %p191
        $region50: #{tpu_custom_call.1} parent=47 // pred_check_branch
          %1956 = sbr.rel (%p1954) target = $region52
        $region51: #{tpu_custom_call.1} parent=47 // pred_region
          %s1958 = ssub.s32 256, 256
          %1959 = vsyncadd %s1950, %s1958
          %s1960 = smul.addr %s21, 4
          %s1961 = smul.addr %s1960, 64
          %s1962 = scalar_lea.hbm %s7, %s1961
          %s1963 = sshll.u32 %s1953, 4
          %s1964 = int_to_ptr.vmem [resolvable:$true] %s1963
          %1969 = dma.vmem_to_hbm [thread:$0]  %s1964, 256, %s1962, %s1950, 64, 64, 4
        $region52: #{tpu_custom_call.1} parent=47 // pred_fallthru
          _
      $region48: #{tpu_custom_call.1} parent=5 // pred_fallthru
        _
      %p1970 = scmp.le.s32.totalorder 2, %s16
      // Predicated region
      $region53: #{tpu_custom_call.1} parent=5 // pred_check
        %p1971 = pneg %p1970
      $region54: #{tpu_custom_call.1} parent=5 // pred_check_branch
        %1973 = sbr.rel (%p1971) target = $region56
      $region55: #{tpu_custom_call.1} parent=5 // pred_region
        %s1974 = ssub.s32 %s16, 2
        // Predicated region
        $region57: #{tpu_custom_call.1} parent=55 // pred_check
          %p1975 = pneg %p197
        $region58: #{tpu_custom_call.1} parent=55 // pred_check_branch
          %1977 = sbr.rel (%p1975) target = $region60
        $region59: #{tpu_custom_call.1} parent=55 // pred_region
          %s1978 = sand.u32 %s182, 1
          %s1979 = scalar_lea.sflag [#allocation6], %s1978
          %s1980 = sand.u32 %s182, 1
          %s1981 = smul.addr %s1980, 16
          %s1982 = scalar_lea.vmem [#allocation5], %s1981
          %1983 = dma.done %s1979, 256
        $region60: #{tpu_custom_call.1} parent=55 // pred_fallthru
          _
      $region56: #{tpu_custom_call.1} parent=5 // pred_fallthru
        _
    $region6: #{tpu_custom_call.1} parent=1 // loop_footer
      %s20 = sadd.s32 1, %s16
    $region7: #{tpu_custom_call.1} parent=1 // loop_footer_branch
      %15 = sbr.rel target = $region3
    $region8: #{tpu_custom_call.1} parent=1 // loop_exit
      _
    %1984 = vsyncpa [#allocation6], 1
    %s1985 = scalar_lea.sflag [#allocation6], 1
    %1986 = vsyncpa %s1985, 1

</llo_original>
